<compile_context>
chip_gen: v6e
topology: v6e:2x2x1
jax: 0.10.0
libtpu: 0.0.40
codegen_flags: <defaults>
</compile_context>

<pallas_src>
import functools
import numpy as np

import jax
import jax.numpy as jnp
from jax.experimental import pallas as pl
from jax.experimental.pallas import tpu as pltpu


# ----------------------------- anchor glue (numpy) ---------------------------

def generate_anchor_base(base_size=16, ratios=(0.5, 1, 2), anchor_scales=(8, 16, 32)):
    py = base_size / 2.0
    px = base_size / 2.0
    anchor_base = np.zeros((len(ratios) * len(anchor_scales), 4), dtype=np.float32)
    for i in range(len(ratios)):
        for j in range(len(anchor_scales)):
            h = base_size * anchor_scales[j] * np.sqrt(ratios[i])
            w = base_size * anchor_scales[j] * np.sqrt(1.0 / ratios[i])
            idx = i * len(anchor_scales) + j
            anchor_base[idx, 0] = py - h / 2.0
            anchor_base[idx, 1] = px - w / 2.0
            anchor_base[idx, 2] = py + h / 2.0
            anchor_base[idx, 3] = px + w / 2.0
    return anchor_base


def _enumerate_shifted_anchor(anchor_base, feat_stride, height, width):
    shift_y = np.arange(0, height * feat_stride, feat_stride)
    shift_x = np.arange(0, width * feat_stride, feat_stride)
    shift_x, shift_y = np.meshgrid(shift_x, shift_y)
    shift = np.stack((shift_y.ravel(), shift_x.ravel(),
                      shift_y.ravel(), shift_x.ravel()), axis=1)
    A = anchor_base.shape[0]
    K = shift.shape[0]
    anchor = anchor_base.reshape((1, A, 4)) + shift.reshape((1, K, 4)).transpose((1, 0, 2))
    return anchor.reshape((K * A, 4)).astype(np.float32)


# --------------------------------- kernel ------------------------------------

def _rpn_kernel(x_ref, w1_ref, b1_ref, wf_ref, bf_ref, out_ref, *, H, TW, A):
    """One (batch, column-tile) per grid step.

    x_ref  : (H+2, TW, 3*Cin)   bf16  dx-packed, 1-row halo, zero-padded input
    w1_ref : (3, 3*Cin, Cmid)   bf16  3x3 conv weights packed over dx
    b1_ref : (1, Cmid)          f32
    wf_ref : (Cmid, OUT_PAD)    bf16  fused [loc | sbg | sfg | sbg-sfg | 0-pad]
    bf_ref : (1, OUT_PAD)       f32
    out_ref: (H, TW, OUT_PAD)   f32   lane-dense slab [locs | sbg | sfg | fg | 0]
    """
    hw = H * TW
    K3 = x_ref.shape[-1]
    Cmid = w1_ref.shape[-1]
    dn2d = (((1,), (0,)), ((), ()))  # 2D matmul: contract lhs dim1 with rhs dim0

    # 3x3 conv as 3 shifted matmuls (dx already folded into the contraction).
    # Static ref slices: only one (H, TW, K3) patch is live at a time.
    acc = jnp.zeros((hw, Cmid), jnp.float32)
    for dy in range(3):
        patch = x_ref[dy:dy + H].reshape(hw, K3)               # relayout-free (TW%8==0)
        acc = acc + jax.lax.dot_general(
            patch, w1_ref[dy], dn2d, preferred_element_type=jnp.float32)
    middle = jnp.maximum(acc + b1_ref[...], 0.0).astype(jnp.bfloat16)

    # Fused 1x1 convs (loc + score + fg-logit-diff) in one lane-dense matmul.
    y = jax.lax.dot_general(middle, wf_ref[...], dn2d,
                            preferred_element_type=jnp.float32) + bf_ref[...]

    # Lanes [6A, 7A) already hold (sbg - sfg); turn them into the foreground
    # probability 1 / (1 + exp(sbg - sfg)).  exp/recip on the other lanes is
    # harmless (selected away); no slices, no concat, pure VPU/EUP work.
    fg = pl.reciprocal(1.0 + jnp.exp(y), approx=True)
    lane = jax.lax.broadcasted_iota(jnp.int32, y.shape, 1)
    y = jnp.where((lane >= 6 * A) & (lane < 7 * A), fg, y)

    out_ref[...] = y.reshape(H, TW, out_ref.shape[-1])          # single full store


# --------------------------------- wrapper -----------------------------------

def rpn_forward(x_nchw, params, img_size, scale=1.0, feat_stride=16,
                anchor_base=None, col_tile=8, vmem_limit_bytes=None):
    """Mirrors RegionProposalNetwork.forward (minus ProposalCreator)."""
    n, Cin, H, W = x_nchw.shape
    w1, b1, wloc, bloc, wsbg, bsbg, wsfg, bsfg = params
    Cmid = w1.shape[-1]
    A = wsbg.shape[-1]

    TW = col_tile
    assert TW % 8 == 0, "col_tile must be a multiple of 8 (sublane-aligned)"
    W_p = ((W + TW - 1) // TW) * TW          # pad W so TW | W_p (extra cols dropped)
    R = W_p // TW

    K3 = 3 * Cin
    OUT_PAD = ((7 * A + 127) // 128) * 128   # locs(4A) + sbg(A) + sfg(A) + fg(A)

    # ---- wrapper-side layout plumbing ----------------------------------------
    # NCHW -> NHWC and cast to bf16 FIRST so all following passes move half bytes.
    x_nhwc = jnp.transpose(x_nchw, (0, 2, 3, 1)).astype(jnp.bfloat16)
    # Zero-pad: 1 row top/bottom (3x3 SAME conv) and columns out to W_p.
    xpad = jnp.pad(x_nhwc, ((0, 0), (1, 1), (1, 1 + W_p - W), (0, 0)))
    # Pack the 3 dx taps into the channel (contraction) dim: (n, H+2, W_p, 3*Cin).
    # With dx folded into channels, width tiles need NO halo, so the kernel grid
    # tiles this tensor directly (no stacked overlapping windows / extra HBM copy).
    xpacked = jnp.concatenate([xpad[:, :, dx:dx + W_p, :] for dx in range(3)], axis=-1)
    # TODO(synk): at production Cin >= ~256 the dx-packing triples input HBM
    # traffic with no extra MXU depth benefit; switch to plain padded NHWC input
    # + 9 matmuls (slice dy/dx from the ref) there.

    # Conv weights packed to match the dx packing: (3, 3*Cin, Cmid).
    w1p = w1.reshape(3, K3, Cmid).astype(jnp.bfloat16)
    b1r = jnp.reshape(b1, (1, Cmid)).astype(jnp.float32)

    # Fused 1x1 weights: [loc | sbg | sfg | (sbg - sfg)] so the MXU emits the fg
    # logit diff directly; zero-padded to a 128-lane multiple.
    wfused = jnp.concatenate([wloc, wsbg, wsfg, wsbg - wsfg], axis=1)        # (Cmid, 7A)
    wfused = jnp.pad(wfused, ((0, 0), (0, OUT_PAD - 7 * A))).astype(jnp.bfloat16)
    bl = jnp.reshape(bloc, (-1,))
    bb = jnp.reshape(bsbg, (-1,))
    bf = jnp.reshape(bsfg, (-1,))
    bfused = jnp.concatenate([bl, bb, bf, bb - bf])
    bfused = jnp.pad(bfused, (0, OUT_PAD - 7 * A)).reshape(1, OUT_PAD).astype(jnp.float32)

    kernel = functools.partial(_rpn_kernel, H=H, TW=TW, A=A)

    # VMEM / tiling guidance at production Cin=Cmid=512:
    #   v5e : pass vmem_limit_bytes explicitly (e.g. 64<<20); the 16 MiB default
    #         scoped VMEM cannot hold the conv weights + tiles.
    #   v6e : 32 MiB default is usually enough with single-buffered weights;
    #         larger col_tile (16-32) amortizes per-grid-step overhead.
    #   v7x : cap vmem_limit_bytes at ~48<<20 (64 MiB physical per TC) and keep
    #         at least 2 column tiles so both TensorCores get work when n == 1.
    compiler_params = pltpu.CompilerParams(
        dimension_semantics=("parallel", "parallel"),
        vmem_limit_bytes=vmem_limit_bytes)

    def build(single_buffer_weights):
        def weight_spec(shape):
            kwargs = {}
            if single_buffer_weights:
                # Grid-invariant operands: no re-DMA, so one VMEM copy suffices.
                kwargs["pipeline_mode"] = pl.Buffered(1)
            return pl.BlockSpec(shape, lambda i, j, _s=shape: (0,) * len(_s), **kwargs)

        return pl.pallas_call(
            kernel,
            out_shape=jax.ShapeDtypeStruct((n, H, W_p, OUT_PAD), jnp.float32),
            grid=(n, R),
            in_specs=[
                pl.BlockSpec((None, H + 2, TW, K3), lambda i, j: (i, 0, j, 0)),
                weight_spec((3, K3, Cmid)),
                weight_spec((1, Cmid)),
                weight_spec((Cmid, OUT_PAD)),
                weight_spec((1, OUT_PAD)),
            ],
            out_specs=pl.BlockSpec((None, H, TW, OUT_PAD), lambda i, j: (i, 0, j, 0)),
            compiler_params=compiler_params,
        )

    try:
        slab = jax.block_until_ready(build(True)(xpacked, w1p, b1r, wfused, bfused))
    except Exception:
        # Fallback for JAX builds that do not plumb pipeline_mode through
        # pallas_call: default 2-deep buffering is correct, just uses more VMEM.
        slab = build(False)(xpacked, w1p, b1r, wfused, bfused)

    # Split the lane-dense slab (cheap wrapper-side slicing / reshapes).
    slab = slab[:, :, :W, :].reshape(n, H * W, OUT_PAD)
    locs = slab[:, :, :4 * A]
    sbg = slab[:, :, 4 * A:5 * A]
    sfg = slab[:, :, 5 * A:6 * A]
    fg = slab[:, :, 6 * A:7 * A]

    rpn_locs = locs.reshape(n, -1, 4)                                # (n, H*W*A, 4)
    rpn_scores = jnp.stack([sbg, sfg], axis=-1).reshape(n, -1, 2)    # (n, H*W*A, 2)
    rpn_fg_scores = fg.reshape(n, -1)                                # (n, H*W*A)

    if anchor_base is None:
        anchor_base = generate_anchor_base()
    anchor = _enumerate_shifted_anchor(np.asarray(anchor_base), feat_stride, H, W)

    # TODO(synk): ProposalCreator (loc decoding, clipping, NMS -> rois/roi_indices)
    # is not defined in the provided module; its host-side numpy loop is omitted.
    return rpn_locs, rpn_scores, rpn_fg_scores, anchor


# -------------------------- deterministic parameters -------------------------

def init_rpn_params(key, in_channels, mid_channels, n_anchor):
    """normal_init(m, 0, 0.01) semantics: weights ~ N(0, 0.01), biases = 0."""
    k1, k2, k3 = jax.random.split(key, 3)
    w1_t = 0.01 * jax.random.normal(k1, (mid_channels, in_channels, 3, 3), jnp.float32)
    b1 = jnp.zeros((mid_channels,), jnp.float32)
    wscore_t = 0.01 * jax.random.normal(k2, (2 * n_anchor, mid_channels, 1, 1), jnp.float32)
    bscore = jnp.zeros((2 * n_anchor,), jnp.float32)
    wloc_t = 0.01 * jax.random.normal(k3, (4 * n_anchor, mid_channels, 1, 1), jnp.float32)
    bloc = jnp.zeros((4 * n_anchor,), jnp.float32)

    # Convert to kernel layouts.
    w1 = jnp.transpose(w1_t, (2, 3, 1, 0))          # (3, 3, Cin, Cmid)  HWIO
    wloc = wloc_t[:, :, 0, 0].T                     # (Cmid, 4*A)
    wscore = wscore_t[:, :, 0, 0].T                 # (Cmid, 2*A)
    # Channel k of the score conv is anchor k//2, class k%2 -> even = bg, odd = fg.
    wsbg, wsfg = wscore[:, 0::2], wscore[:, 1::2]
    kernel_params = (
        w1, b1.reshape(1, -1),
        wloc, bloc.reshape(1, -1),
        wsbg, bscore[0::2].reshape(1, -1),
        wsfg, bscore[1::2].reshape(1, -1),
    )
    torch_like = (w1_t, b1, wscore_t, bscore, wloc_t, bloc)
    return kernel_params, torch_like


# ------------------------------ pure-JAX reference ---------------------------

def reference_forward(x_nchw, torch_like, n_anchor):
    # Inputs/weights are rounded through bf16 (matching the kernel's bf16 MXU
    # math with f32 accumulation); all arithmetic stays f32.
    w1_t, b1, wscore_t, bscore, wloc_t, bloc = torch_like
    n, Cin, H, W = x_nchw.shape
    bf16 = lambda a: a.astype(jnp.bfloat16).astype(jnp.float32)

    x = bf16(jnp.transpose(x_nchw, (0, 2, 3, 1)))
    w1 = bf16(jnp.transpose(w1_t, (2, 3, 1, 0)))
    mid = jax.lax.conv_general_dilated(
        x, w1, (1, 1), "SAME",
        dimension_numbers=("NHWC", "HWIO", "NHWC")) + b1
    mid = bf16(jnp.maximum(mid, 0.0))

    wloc = bf16(wloc_t[:, :, 0, 0].T)
    wscore = bf16(wscore_t[:, :, 0, 0].T)
    locs = jnp.einsum("nhwc,co->nhwo", mid, wloc) + bloc
    scores = jnp.einsum("nhwc,co->nhwo", mid, wscore) + bscore

    rpn_locs = locs.reshape(n, -1, 4)
    scores5 = scores.reshape(n, H, W, n_anchor, 2)
    soft = jax.nn.softmax(scores5, axis=-1)
    rpn_fg = soft[..., 1].reshape(n, -1)
    rpn_scores = scores5.reshape(n, -1, 2)
    return rpn_locs, rpn_scores, rpn_fg


# ----------------------------------- main ------------------------------------

if __name__ == "__main__":
    # Small shapes consistent with the module (in=512/mid=512 scaled down).
    N, CIN, CMID, H, W = 2, 16, 32, 16, 16
    N_ANCHOR = 9          # len(ratios) * len(anchor_scales) = 3 * 3
    FEAT_STRIDE = 16

    key = jax.random.PRNGKey(0)
    kx, kp = jax.random.split(key)
    x = jax.random.normal(kx, (N, CIN, H, W), jnp.float32)          # NCHW like PyTorch
    params, torch_like = init_rpn_params(kp, CIN, CMID, N_ANCHOR)

    img_size = (H * FEAT_STRIDE, W * FEAT_STRIDE)
    rpn_locs, rpn_scores, rpn_fg_scores, anchor = rpn_forward(
        x, params, img_size, scale=1.0, feat_stride=FEAT_STRIDE, col_tile=8)
    jax.block_until_ready((rpn_locs, rpn_scores, rpn_fg_scores))

    # Correctness check against a pure-JAX reference of the PyTorch math.
    ref_locs, ref_scores, ref_fg = reference_forward(x, torch_like, N_ANCHOR)
    np.testing.assert_allclose(np.asarray(rpn_locs), np.asarray(ref_locs),
                               rtol=5e-4, atol=5e-5)
    np.testing.assert_allclose(np.asarray(rpn_scores), np.asarray(ref_scores),
                               rtol=5e-4, atol=5e-5)
    # fg uses the fused logit-diff lane + approx-reciprocal sigmoid -> looser tol.
    np.testing.assert_allclose(np.asarray(rpn_fg_scores), np.asarray(ref_fg),
                               rtol=5e-3, atol=5e-3)

    assert rpn_locs.shape == (N, H * W * N_ANCHOR, 4)
    assert rpn_scores.shape == (N, H * W * N_ANCHOR, 2)
    assert rpn_fg_scores.shape == (N, H * W * N_ANCHOR)
    assert anchor.shape == (H * W * N_ANCHOR, 4)

    print("KERNEL_OK")
</pallas_src>

<mosaic_0001>
module attributes {stable_mosaic.version = 11 : i64} {
  func.func @_rpn_kernel(%arg0: i32, %arg1: i32, %arg2: memref<1x18x8x48xbf16, #tpu.memory_space<vmem>>, %arg3: memref<3x48x32xbf16, #tpu.memory_space<vmem>>, %arg4: memref<1x32xf32, #tpu.memory_space<vmem>>, %arg5: memref<32x128xbf16, #tpu.memory_space<vmem>>, %arg6: memref<1x128xf32, #tpu.memory_space<vmem>>, %arg7: memref<1x16x8x128xf32, #tpu.memory_space<vmem>>) attributes {dimension_semantics = [#tpu.dimension_semantics<parallel>, #tpu.dimension_semantics<parallel>], iteration_bounds = array<i64: 2, 2>, scalar_prefetch = 0 : i64, scratch_operands = 0 : i64, tpu.core_type = #tpu.core_type<tc>, window_params = [{transform_indices = @transform_0, window_bounds = array<i64: 1, 18, 8, 48>}, {pipeline_mode = #tpu.pipeline_mode<synchronous>, transform_indices = @transform_1, window_bounds = array<i64: 3, 48, 32>}, {pipeline_mode = #tpu.pipeline_mode<synchronous>, transform_indices = @transform_2, window_bounds = array<i64: 1, 32>}, {pipeline_mode = #tpu.pipeline_mode<synchronous>, transform_indices = @transform_3, window_bounds = array<i64: 32, 128>}, {pipeline_mode = #tpu.pipeline_mode<synchronous>, transform_indices = @transform_4, window_bounds = array<i64: 1, 128>}, {transform_indices = @transform_5, window_bounds = array<i64: 1, 16, 8, 128>}]} {
    %cst = arith.constant 0.000000e+00 : f32
    %0 = vector.broadcast %cst : f32 to vector<128x32xf32>
    %c0 = arith.constant 0 : index
    %c0_0 = arith.constant 0 : index
    %c0_1 = arith.constant 0 : index
    %c0_2 = arith.constant 0 : index
    %1 = vector.load %arg2[%c0, %c0_0, %c0_1, %c0_2] : memref<1x18x8x48xbf16, #tpu.memory_space<vmem>>, vector<1x16x8x48xbf16>
    %2 = vector.shape_cast %1 : vector<1x16x8x48xbf16> to vector<16x8x48xbf16>
    %3 = vector.shape_cast %2 : vector<16x8x48xbf16> to vector<128x48xbf16>
    %c0_3 = arith.constant 0 : index
    %c0_4 = arith.constant 0 : index
    %c0_5 = arith.constant 0 : index
    %4 = vector.load %arg3[%c0_3, %c0_4, %c0_5] : memref<3x48x32xbf16, #tpu.memory_space<vmem>>, vector<1x48x32xbf16>
    %5 = vector.shape_cast %4 : vector<1x48x32xbf16> to vector<48x32xbf16>
    %cst_6 = arith.constant dense<0.000000e+00> : vector<128x32xf32>
    %6 = tpu.matmul %3, %5, %cst_6 {dimension_numbers = #tpu.dot_dimension_numbers<[1], [0], [0], [1], [0, 0, 1, 1], [], []>} : vector<128x48xbf16>, vector<48x32xbf16>, vector<128x32xf32> -> vector<128x32xf32>
    %7 = arith.addf %0, %6 : vector<128x32xf32>
    %c0_7 = arith.constant 0 : index
    %c1 = arith.constant 1 : index
    %c0_8 = arith.constant 0 : index
    %c0_9 = arith.constant 0 : index
    %8 = vector.load %arg2[%c0_7, %c1, %c0_8, %c0_9] : memref<1x18x8x48xbf16, #tpu.memory_space<vmem>>, vector<1x16x8x48xbf16>
    %9 = vector.shape_cast %8 : vector<1x16x8x48xbf16> to vector<16x8x48xbf16>
    %10 = vector.shape_cast %9 : vector<16x8x48xbf16> to vector<128x48xbf16>
    %c1_10 = arith.constant 1 : index
    %c0_11 = arith.constant 0 : index
    %c0_12 = arith.constant 0 : index
    %11 = vector.load %arg3[%c1_10, %c0_11, %c0_12] : memref<3x48x32xbf16, #tpu.memory_space<vmem>>, vector<1x48x32xbf16>
    %12 = vector.shape_cast %11 : vector<1x48x32xbf16> to vector<48x32xbf16>
    %cst_13 = arith.constant dense<0.000000e+00> : vector<128x32xf32>
    %13 = tpu.matmul %10, %12, %cst_13 {dimension_numbers = #tpu.dot_dimension_numbers<[1], [0], [0], [1], [0, 0, 1, 1], [], []>} : vector<128x48xbf16>, vector<48x32xbf16>, vector<128x32xf32> -> vector<128x32xf32>
    %14 = arith.addf %7, %13 : vector<128x32xf32>
    %c0_14 = arith.constant 0 : index
    %c2 = arith.constant 2 : index
    %c0_15 = arith.constant 0 : index
    %c0_16 = arith.constant 0 : index
    %15 = vector.load %arg2[%c0_14, %c2, %c0_15, %c0_16] : memref<1x18x8x48xbf16, #tpu.memory_space<vmem>>, vector<1x16x8x48xbf16>
    %16 = vector.shape_cast %15 : vector<1x16x8x48xbf16> to vector<16x8x48xbf16>
    %17 = vector.shape_cast %16 : vector<16x8x48xbf16> to vector<128x48xbf16>
    %c2_17 = arith.constant 2 : index
    %c0_18 = arith.constant 0 : index
    %c0_19 = arith.constant 0 : index
    %18 = vector.load %arg3[%c2_17, %c0_18, %c0_19] : memref<3x48x32xbf16, #tpu.memory_space<vmem>>, vector<1x48x32xbf16>
    %19 = vector.shape_cast %18 : vector<1x48x32xbf16> to vector<48x32xbf16>
    %cst_20 = arith.constant dense<0.000000e+00> : vector<128x32xf32>
    %20 = tpu.matmul %17, %19, %cst_20 {dimension_numbers = #tpu.dot_dimension_numbers<[1], [0], [0], [1], [0, 0, 1, 1], [], []>} : vector<128x48xbf16>, vector<48x32xbf16>, vector<128x32xf32> -> vector<128x32xf32>
    %21 = arith.addf %14, %20 : vector<128x32xf32>
    %c0_21 = arith.constant 0 : index
    %c0_22 = arith.constant 0 : index
    %22 = vector.load %arg4[%c0_21, %c0_22] : memref<1x32xf32, #tpu.memory_space<vmem>>, vector<1x32xf32>
    %23 = vector.broadcast %22 : vector<1x32xf32> to vector<128x32xf32>
    %24 = arith.addf %21, %23 : vector<128x32xf32>
    %cst_23 = arith.constant 0.000000e+00 : f32
    %25 = vector.broadcast %cst_23 : f32 to vector<128x32xf32>
    %26 = arith.maximumf %24, %25 : vector<128x32xf32>
    %27 = arith.truncf %26 : vector<128x32xf32> to vector<128x32xbf16>
    %c0_24 = arith.constant 0 : index
    %c0_25 = arith.constant 0 : index
    %28 = vector.load %arg5[%c0_24, %c0_25] : memref<32x128xbf16, #tpu.memory_space<vmem>>, vector<32x128xbf16>
    %cst_26 = arith.constant dense<0.000000e+00> : vector<128x128xf32>
    %29 = tpu.matmul %27, %28, %cst_26 {dimension_numbers = #tpu.dot_dimension_numbers<[1], [0], [0], [1], [0, 0, 1, 1], [], []>} : vector<128x32xbf16>, vector<32x128xbf16>, vector<128x128xf32> -> vector<128x128xf32>
    %c0_27 = arith.constant 0 : index
    %c0_28 = arith.constant 0 : index
    %30 = vector.load %arg6[%c0_27, %c0_28] : memref<1x128xf32, #tpu.memory_space<vmem>>, vector<1x128xf32>
    %31 = vector.broadcast %30 : vector<1x128xf32> to vector<128x128xf32>
    %32 = arith.addf %29, %31 : vector<128x128xf32>
    %33 = math.exp %32 : vector<128x128xf32>
    %cst_29 = arith.constant 1.000000e+00 : f32
    %34 = vector.broadcast %cst_29 : f32 to vector<128x128xf32>
    %35 = arith.addf %34, %33 : vector<128x128xf32>
    %36 = tpu.reciprocal %35 {approx = true} : vector<128x128xf32> -> vector<128x128xf32>
    %37 = tpu.iota {dimensions = array<i32: 1>} : vector<128x128xi32>
    %c54_i32 = arith.constant 54 : i32
    %38 = vector.broadcast %c54_i32 : i32 to vector<128x128xi32>
    %39 = arith.cmpi sge, %37, %38 : vector<128x128xi32>
    %c63_i32 = arith.constant 63 : i32
    %40 = vector.broadcast %c63_i32 : i32 to vector<128x128xi32>
    %41 = arith.cmpi slt, %37, %40 : vector<128x128xi32>
    %42 = arith.andi %39, %41 : vector<128x128xi1>
    %43 = arith.select %42, %36, %32 : vector<128x128xi1>, vector<128x128xf32>
    %44 = vector.shape_cast %43 : vector<128x128xf32> to vector<16x8x128xf32>
    %c0_30 = arith.constant 0 : index
    %c0_31 = arith.constant 0 : index
    %c0_32 = arith.constant 0 : index
    %c0_33 = arith.constant 0 : index
    %45 = vector.load %arg7[%c0_30, %c0_31, %c0_32, %c0_33] : memref<1x16x8x128xf32, #tpu.memory_space<vmem>>, vector<1x16x8x128xf32>
    %46 = vector.shape_cast %45 : vector<1x16x8x128xf32> to vector<16x8x128xf32>
    %47 = vector.shape_cast %44 : vector<16x8x128xf32> to vector<1x16x8x128xf32>
    tpu.vector_store %arg7[%c0_30, %c0_31, %c0_32, %c0_33], %47 {strides = array<i32>} : memref<1x16x8x128xf32, #tpu.memory_space<vmem>>, vector<1x16x8x128xf32>,
    return
  }
  func.func @transform_0(%arg0: i32, %arg1: i32) -> (i32, i32, i32, i32) {
    %c0_i32 = arith.constant 0 : i32
    %c0_i32_0 = arith.constant 0 : i32
    %c0_i32_1 = arith.constant 0 : i32
    return %arg0, %c0_i32, %arg1, %c0_i32_0 : i32, i32, i32, i32
  }
  func.func @transform_1(%arg0: i32, %arg1: i32) -> (i32, i32, i32) {
    %c0_i32 = arith.constant 0 : i32
    %c0_i32_0 = arith.constant 0 : i32
    %c0_i32_1 = arith.constant 0 : i32
    %c0_i32_2 = arith.constant 0 : i32
    return %c0_i32, %c0_i32_0, %c0_i32_1 : i32, i32, i32
  }
  func.func @transform_2(%arg0: i32, %arg1: i32) -> (i32, i32) {
    %c0_i32 = arith.constant 0 : i32
    %c0_i32_0 = arith.constant 0 : i32
    %c0_i32_1 = arith.constant 0 : i32
    return %c0_i32, %c0_i32_0 : i32, i32
  }
  func.func @transform_3(%arg0: i32, %arg1: i32) -> (i32, i32) {
    %c0_i32 = arith.constant 0 : i32
    %c0_i32_0 = arith.constant 0 : i32
    %c0_i32_1 = arith.constant 0 : i32
    return %c0_i32, %c0_i32_0 : i32, i32
  }
  func.func @transform_4(%arg0: i32, %arg1: i32) -> (i32, i32) {
    %c0_i32 = arith.constant 0 : i32
    %c0_i32_0 = arith.constant 0 : i32
    %c0_i32_1 = arith.constant 0 : i32
    return %c0_i32, %c0_i32_0 : i32, i32
  }
  func.func @transform_5(%arg0: i32, %arg1: i32) -> (i32, i32, i32, i32) {
    %c0_i32 = arith.constant 0 : i32
    %c0_i32_0 = arith.constant 0 : i32
    %c0_i32_1 = arith.constant 0 : i32
    return %arg0, %c0_i32, %arg1, %c0_i32_0 : i32, i32, i32, i32
  }
}

module attributes {stable_mosaic.version = 11 : i64} {
  func.func @_rpn_kernel(%arg0: i32, %arg1: i32, %arg2: memref<1x18x8x48xbf16, #tpu.memory_space<vmem>>, %arg3: memref<3x48x32xbf16, #tpu.memory_space<vmem>>, %arg4: memref<1x32xf32, #tpu.memory_space<vmem>>, %arg5: memref<32x128xbf16, #tpu.memory_space<vmem>>, %arg6: memref<1x128xf32, #tpu.memory_space<vmem>>, %arg7: memref<1x16x8x128xf32, #tpu.memory_space<vmem>>) attributes {dimension_semantics = [#tpu.dimension_semantics<parallel>, #tpu.dimension_semantics<parallel>], iteration_bounds = array<i64: 2, 2>, scalar_prefetch = 0 : i64, scratch_operands = 0 : i64, tpu.core_type = #tpu.core_type<tc>, window_params = [{transform_indices = @transform_0, window_bounds = array<i64: 1, 18, 8, 48>}, {pipeline_mode = #tpu.pipeline_mode<synchronous>, transform_indices = @transform_1, window_bounds = array<i64: 3, 48, 32>}, {pipeline_mode = #tpu.pipeline_mode<synchronous>, transform_indices = @transform_2, window_bounds = array<i64: 1, 32>}, {pipeline_mode = #tpu.pipeline_mode<synchronous>, transform_indices = @transform_3, window_bounds = array<i64: 32, 128>}, {pipeline_mode = #tpu.pipeline_mode<synchronous>, transform_indices = @transform_4, window_bounds = array<i64: 1, 128>}, {transform_indices = @transform_5, window_bounds = array<i64: 1, 16, 8, 128>}]} {
    %cst = arith.constant 0.000000e+00 : f32
    %0 = vector.broadcast %cst : f32 to vector<128x32xf32>
    %c0 = arith.constant 0 : index
    %c0_0 = arith.constant 0 : index
    %c0_1 = arith.constant 0 : index
    %c0_2 = arith.constant 0 : index
    %1 = vector.load %arg2[%c0, %c0_0, %c0_1, %c0_2] : memref<1x18x8x48xbf16, #tpu.memory_space<vmem>>, vector<1x16x8x48xbf16>
    %2 = vector.shape_cast %1 : vector<1x16x8x48xbf16> to vector<16x8x48xbf16>
    %3 = vector.shape_cast %2 : vector<16x8x48xbf16> to vector<128x48xbf16>
    %c0_3 = arith.constant 0 : index
    %c0_4 = arith.constant 0 : index
    %c0_5 = arith.constant 0 : index
    %4 = vector.load %arg3[%c0_3, %c0_4, %c0_5] : memref<3x48x32xbf16, #tpu.memory_space<vmem>>, vector<1x48x32xbf16>
    %5 = vector.shape_cast %4 : vector<1x48x32xbf16> to vector<48x32xbf16>
    %cst_6 = arith.constant dense<0.000000e+00> : vector<128x32xf32>
    %6 = tpu.matmul %3, %5, %cst_6 {dimension_numbers = #tpu.dot_dimension_numbers<[1], [0], [0], [1], [0, 0, 1, 1], [], []>} : vector<128x48xbf16>, vector<48x32xbf16>, vector<128x32xf32> -> vector<128x32xf32>
    %7 = arith.addf %0, %6 : vector<128x32xf32>
    %c0_7 = arith.constant 0 : index
    %c1 = arith.constant 1 : index
    %c0_8 = arith.constant 0 : index
    %c0_9 = arith.constant 0 : index
    %8 = vector.load %arg2[%c0_7, %c1, %c0_8, %c0_9] : memref<1x18x8x48xbf16, #tpu.memory_space<vmem>>, vector<1x16x8x48xbf16>
    %9 = vector.shape_cast %8 : vector<1x16x8x48xbf16> to vector<16x8x48xbf16>
    %10 = vector.shape_cast %9 : vector<16x8x48xbf16> to vector<128x48xbf16>
    %c1_10 = arith.constant 1 : index
    %c0_11 = arith.constant 0 : index
    %c0_12 = arith.constant 0 : index
    %11 = vector.load %arg3[%c1_10, %c0_11, %c0_12] : memref<3x48x32xbf16, #tpu.memory_space<vmem>>, vector<1x48x32xbf16>
    %12 = vector.shape_cast %11 : vector<1x48x32xbf16> to vector<48x32xbf16>
    %cst_13 = arith.constant dense<0.000000e+00> : vector<128x32xf32>
    %13 = tpu.matmul %10, %12, %cst_13 {dimension_numbers = #tpu.dot_dimension_numbers<[1], [0], [0], [1], [0, 0, 1, 1], [], []>} : vector<128x48xbf16>, vector<48x32xbf16>, vector<128x32xf32> -> vector<128x32xf32>
    %14 = arith.addf %7, %13 : vector<128x32xf32>
    %c0_14 = arith.constant 0 : index
    %c2 = arith.constant 2 : index
    %c0_15 = arith.constant 0 : index
    %c0_16 = arith.constant 0 : index
    %15 = vector.load %arg2[%c0_14, %c2, %c0_15, %c0_16] : memref<1x18x8x48xbf16, #tpu.memory_space<vmem>>, vector<1x16x8x48xbf16>
    %16 = vector.shape_cast %15 : vector<1x16x8x48xbf16> to vector<16x8x48xbf16>
    %17 = vector.shape_cast %16 : vector<16x8x48xbf16> to vector<128x48xbf16>
    %c2_17 = arith.constant 2 : index
    %c0_18 = arith.constant 0 : index
    %c0_19 = arith.constant 0 : index
    %18 = vector.load %arg3[%c2_17, %c0_18, %c0_19] : memref<3x48x32xbf16, #tpu.memory_space<vmem>>, vector<1x48x32xbf16>
    %19 = vector.shape_cast %18 : vector<1x48x32xbf16> to vector<48x32xbf16>
    %cst_20 = arith.constant dense<0.000000e+00> : vector<128x32xf32>
    %20 = tpu.matmul %17, %19, %cst_20 {dimension_numbers = #tpu.dot_dimension_numbers<[1], [0], [0], [1], [0, 0, 1, 1], [], []>} : vector<128x48xbf16>, vector<48x32xbf16>, vector<128x32xf32> -> vector<128x32xf32>
    %21 = arith.addf %14, %20 : vector<128x32xf32>
    %c0_21 = arith.constant 0 : index
    %c0_22 = arith.constant 0 : index
    %22 = vector.load %arg4[%c0_21, %c0_22] : memref<1x32xf32, #tpu.memory_space<vmem>>, vector<1x32xf32>
    %23 = vector.broadcast %22 : vector<1x32xf32> to vector<128x32xf32>
    %24 = arith.addf %21, %23 : vector<128x32xf32>
    %cst_23 = arith.constant 0.000000e+00 : f32
    %25 = vector.broadcast %cst_23 : f32 to vector<128x32xf32>
    %26 = arith.maximumf %24, %25 : vector<128x32xf32>
    %27 = arith.truncf %26 : vector<128x32xf32> to vector<128x32xbf16>
    %c0_24 = arith.constant 0 : index
    %c0_25 = arith.constant 0 : index
    %28 = vector.load %arg5[%c0_24, %c0_25] : memref<32x128xbf16, #tpu.memory_space<vmem>>, vector<32x128xbf16>
    %cst_26 = arith.constant dense<0.000000e+00> : vector<128x128xf32>
    %29 = tpu.matmul %27, %28, %cst_26 {dimension_numbers = #tpu.dot_dimension_numbers<[1], [0], [0], [1], [0, 0, 1, 1], [], []>} : vector<128x32xbf16>, vector<32x128xbf16>, vector<128x128xf32> -> vector<128x128xf32>
    %c0_27 = arith.constant 0 : index
    %c0_28 = arith.constant 0 : index
    %30 = vector.load %arg6[%c0_27, %c0_28] : memref<1x128xf32, #tpu.memory_space<vmem>>, vector<1x128xf32>
    %31 = vector.broadcast %30 : vector<1x128xf32> to vector<128x128xf32>
    %32 = arith.addf %29, %31 : vector<128x128xf32>
    %33 = math.exp %32 : vector<128x128xf32>
    %cst_29 = arith.constant 1.000000e+00 : f32
    %34 = vector.broadcast %cst_29 : f32 to vector<128x128xf32>
    %35 = arith.addf %34, %33 : vector<128x128xf32>
    %36 = tpu.reciprocal %35 {approx = true} : vector<128x128xf32> -> vector<128x128xf32>
    %37 = tpu.iota {dimensions = array<i32: 1>} : vector<128x128xi32>
    %c54_i32 = arith.constant 54 : i32
    %38 = vector.broadcast %c54_i32 : i32 to vector<128x128xi32>
    %39 = arith.cmpi sge, %37, %38 : vector<128x128xi32>
    %c63_i32 = arith.constant 63 : i32
    %40 = vector.broadcast %c63_i32 : i32 to vector<128x128xi32>
    %41 = arith.cmpi slt, %37, %40 : vector<128x128xi32>
    %42 = arith.andi %39, %41 : vector<128x128xi1>
    %43 = arith.select %42, %36, %32 : vector<128x128xi1>, vector<128x128xf32>
    %44 = vector.shape_cast %43 : vector<128x128xf32> to vector<16x8x128xf32>
    %c0_30 = arith.constant 0 : index
    %c0_31 = arith.constant 0 : index
    %c0_32 = arith.constant 0 : index
    %c0_33 = arith.constant 0 : index
    %45 = vector.load %arg7[%c0_30, %c0_31, %c0_32, %c0_33] : memref<1x16x8x128xf32, #tpu.memory_space<vmem>>, vector<1x16x8x128xf32>
    %46 = vector.shape_cast %45 : vector<1x16x8x128xf32> to vector<16x8x128xf32>
    %47 = vector.shape_cast %44 : vector<16x8x128xf32> to vector<1x16x8x128xf32>
    tpu.vector_store %arg7[%c0_30, %c0_31, %c0_32, %c0_33], %47 {strides = array<i32>} : memref<1x16x8x128xf32, #tpu.memory_space<vmem>>, vector<1x16x8x128xf32>,
    return
  }
  func.func @transform_0(%arg0: i32, %arg1: i32) -> (i32, i32, i32, i32) {
    %c0_i32 = arith.constant 0 : i32
    %c0_i32_0 = arith.constant 0 : i32
    %c0_i32_1 = arith.constant 0 : i32
    return %arg0, %c0_i32, %arg1, %c0_i32_0 : i32, i32, i32, i32
  }
  func.func @transform_1(%arg0: i32, %arg1: i32) -> (i32, i32, i32) {
    %c0_i32 = arith.constant 0 : i32
    %c0_i32_0 = arith.constant 0 : i32
    %c0_i32_1 = arith.constant 0 : i32
    %c0_i32_2 = arith.constant 0 : i32
    return %c0_i32, %c0_i32_0, %c0_i32_1 : i32, i32, i32
  }
  func.func @transform_2(%arg0: i32, %arg1: i32) -> (i32, i32) {
    %c0_i32 = arith.constant 0 : i32
    %c0_i32_0 = arith.constant 0 : i32
    %c0_i32_1 = arith.constant 0 : i32
    return %c0_i32, %c0_i32_0 : i32, i32
  }
  func.func @transform_3(%arg0: i32, %arg1: i32) -> (i32, i32) {
    %c0_i32 = arith.constant 0 : i32
    %c0_i32_0 = arith.constant 0 : i32
    %c0_i32_1 = arith.constant 0 : i32
    return %c0_i32, %c0_i32_0 : i32, i32
  }
  func.func @transform_4(%arg0: i32, %arg1: i32) -> (i32, i32) {
    %c0_i32 = arith.constant 0 : i32
    %c0_i32_0 = arith.constant 0 : i32
    %c0_i32_1 = arith.constant 0 : i32
    return %c0_i32, %c0_i32_0 : i32, i32
  }
  func.func @transform_5(%arg0: i32, %arg1: i32) -> (i32, i32, i32, i32) {
    %c0_i32 = arith.constant 0 : i32
    %c0_i32_0 = arith.constant 0 : i32
    %c0_i32_1 = arith.constant 0 : i32
    return %arg0, %c0_i32, %arg1, %c0_i32_0 : i32, i32, i32, i32
  }
}

</mosaic_0001>

<llo_original>
// kernel: tpu_custom_call.1
$region0: #{tpu_custom_call.1}
  #allocation0 [shape = 'u32[]', space=smem, size = 0x4, offset = 0x4, fixed_abs, tag = 'smem constant byte address 0x4 - core index']
  #allocation1 [shape = 'u32[144,128]{1,0:T(1,128)}', space=vmem, size = 0x12000, scoped, tag = 'internal scratch']
  %s0 = inlined_call_operand.hbm [shape: bf16[2,18,16,48], index: 0, kind: input, shape index: {}]
  %s1 = inlined_call_operand.vmem [shape: bf16[3,48,32], index: 1, kind: input, shape index: {}]
  %s2 = inlined_call_operand.vmem [shape: f32[1,32], index: 2, kind: input, shape index: {}]
  %s3 = inlined_call_operand.vmem [shape: bf16[32,128], index: 3, kind: input, shape index: {}]
  %s4 = inlined_call_operand.vmem [shape: f32[1,128], index: 4, kind: input, shape index: {}]
  %s5 = inlined_call_operand.hbm [shape: f32[2,16,16,128], index: 5, kind: output, shape index: {}]
  %s6 = sld [smem:[#allocation0]]
  $region57: #{tpu_custom_call.1} parent=0
    _
  %s8 = ssub.s32 1, %s6
  %s9 = scalar_select 0, %s8, %s6
  $region1: #{tpu_custom_call.1} parent=0
    #allocation2 [shape = 'u8[73728]{0}', space=vmem, size = 0x12000, scoped, tag = 'input window, operand 0']
    #allocation3 [shape = 's32[2]{0}', space=sflag, size = 0x8, scoped, tag = 'scoped memory for tpu_custom_call.1']
    #allocation4 [shape = 's32[2]{0}', space=sflag, size = 0x8, scoped, tag = 'scoped memory for tpu_custom_call.1']
    #allocation5 [shape = 'u8[131072]{0}', space=vmem, size = 0x20000, scoped, tag = 'output window, operand 0']
    %10 = vsyncpa [#allocation3], 0
    %s11 = scalar_lea.sflag [#allocation3], 1
    %12 = vsyncpa %s11, 0
    %13 = vsyncpa [#allocation4], 0
    %s14 = scalar_lea.sflag [#allocation4], 1
    %15 = vsyncpa %s14, 0
    loop: start=0, step=1, limit=6
    $region2: #{tpu_custom_call.1} parent=1 // loop_pre_header
      _
    $region3: #{tpu_custom_call.1} parent=1 // loop_header
      %s17 = sphi 0, %s21
      %p18 = scmp.ge.s32.totalorder %s17, 6
      %s24 = sphi 0, %s36
      %s25 = sphi 0, %s32
      %s26 = sphi 0, %s24
      %s27 = sphi 0, %s25
      %s28 = sphi 0, %s26
      %s29 = sphi 0, %s27
      %s41 = sphi 0, %s43
      %s44 = sphi 0, %s41
      %s45 = sphi 0, %s44
      %s61 = sphi 0, %s45
      %s65 = sphi 0, %s65
      %s67 = sphi 0, %s65
      %s68 = sphi 0, %s67
      %s82 = sphi 0, %s68
      %s86 = sphi 0, %s86
      %s88 = sphi 0, %s86
      %s89 = sphi 0, %s88
      %s103 = sphi 0, %s89
      %s107 = sphi 0, %s107
      %s109 = sphi 0, %s107
      %s110 = sphi 0, %s109
      %s124 = sphi 0, %s110
      %s128 = sphi 0, %s128
      %s130 = sphi 0, %s128
      %s131 = sphi 0, %s130
      %s145 = sphi 0, %s131
      %s153 = sphi 0, %s155
      %s156 = sphi 0, %s153
      %s157 = sphi 0, %s156
      %s173 = sphi 0, %s157
    $region4: #{tpu_custom_call.1} parent=1 // loop_header_branch
      %20 = sbr.rel (%p18) target = $region8
    $region5: #{tpu_custom_call.1} parent=1 // loop_body
      %s22 = ssub.s32 %s17, 1
      %s23 = ssub.s32 %s17, 2
      %s30 = sadd.s32 1, %s25
      %p31 = scmp.ge.s32.totalorder %s30, 2
      %s32 = scalar_select %p31, 0, %s30
      %s33 = sadd.s32 1, %s24
      %s34 = scalar_select %p31, %s33, %s24
      %p35 = scmp.ge.s32.totalorder %s34, 2
      %s36 = scalar_select %p35, 0, %s34
      %s37 = ssub.s32 %s24, %s36
      %s38 = ssub.s32 %s25, %s32
      %s39 = sor.u32 %s37, %s38
      %p40 = scmp.eq.s32.totalorder %s39, 0
      %s42 = sadd.s32 %s41, 1
      %s43 = scalar_select %p40, %s41, %s42
      %p46 = pneg %p40
      %p47 = scmp.eq.s32.totalorder %s17, 3
      %p48 = por %p46, %p47
      %p49 = scmp.ne.s32.totalorder %s41, %s44
      %p50 = scmp.eq.s32.totalorder %s17, 0
      %p51 = por %p49, %p50
      %p52 = scmp.ne.s32.totalorder %s41, %s44
      %p53 = scmp.eq.s32.totalorder %s22, 3
      %p54 = por %p52, %p53
      %p55 = scmp.ne.s32.totalorder %s44, %s45
      %p56 = scmp.eq.s32.totalorder %s22, 0
      %p57 = por %p55, %p56
      %p58 = scmp.ne.s32.totalorder %s44, %s45
      %p59 = scmp.eq.s32.totalorder %s23, 3
      %p60 = por %p58, %p59
      %p62 = scmp.ne.s32.totalorder %s45, %s61
      %p63 = scmp.eq.s32.totalorder %s23, 0
      %p64 = por %p62, %p63
      %s66 = sadd.s32 %s65, 1
      %p69 = scmp.eq.s32.totalorder %s17, 3
      %p70 = scmp.ne.s32.totalorder %s65, %s67
      %p71 = scmp.eq.s32.totalorder %s17, 0
      %p72 = por %p70, %p71
      %p73 = scmp.ne.s32.totalorder %s65, %s67
      %p74 = scmp.eq.s32.totalorder %s22, 3
      %p75 = por %p73, %p74
      %p76 = scmp.ne.s32.totalorder %s67, %s68
      %p77 = scmp.eq.s32.totalorder %s22, 0
      %p78 = por %p76, %p77
      %p79 = scmp.ne.s32.totalorder %s67, %s68
      %p80 = scmp.eq.s32.totalorder %s23, 3
      %p81 = por %p79, %p80
      %p83 = scmp.ne.s32.totalorder %s68, %s82
      %p84 = scmp.eq.s32.totalorder %s23, 0
      %p85 = por %p83, %p84
      %s87 = sadd.s32 %s86, 1
      %p90 = scmp.eq.s32.totalorder %s17, 3
      %p91 = scmp.ne.s32.totalorder %s86, %s88
      %p92 = scmp.eq.s32.totalorder %s17, 0
      %p93 = por %p91, %p92
      %p94 = scmp.ne.s32.totalorder %s86, %s88
      %p95 = scmp.eq.s32.totalorder %s22, 3
      %p96 = por %p94, %p95
      %p97 = scmp.ne.s32.totalorder %s88, %s89
      %p98 = scmp.eq.s32.totalorder %s22, 0
      %p99 = por %p97, %p98
      %p100 = scmp.ne.s32.totalorder %s88, %s89
      %p101 = scmp.eq.s32.totalorder %s23, 3
      %p102 = por %p100, %p101
      %p104 = scmp.ne.s32.totalorder %s89, %s103
      %p105 = scmp.eq.s32.totalorder %s23, 0
      %p106 = por %p104, %p105
      %s108 = sadd.s32 %s107, 1
      %p111 = scmp.eq.s32.totalorder %s17, 3
      %p112 = scmp.ne.s32.totalorder %s107, %s109
      %p113 = scmp.eq.s32.totalorder %s17, 0
      %p114 = por %p112, %p113
      %p115 = scmp.ne.s32.totalorder %s107, %s109
      %p116 = scmp.eq.s32.totalorder %s22, 3
      %p117 = por %p115, %p116
      %p118 = scmp.ne.s32.totalorder %s109, %s110
      %p119 = scmp.eq.s32.totalorder %s22, 0
      %p120 = por %p118, %p119
      %p121 = scmp.ne.s32.totalorder %s109, %s110
      %p122 = scmp.eq.s32.totalorder %s23, 3
      %p123 = por %p121, %p122
      %p125 = scmp.ne.s32.totalorder %s110, %s124
      %p126 = scmp.eq.s32.totalorder %s23, 0
      %p127 = por %p125, %p126
      %s129 = sadd.s32 %s128, 1
      %p132 = scmp.eq.s32.totalorder %s17, 3
      %p133 = scmp.ne.s32.totalorder %s128, %s130
      %p134 = scmp.eq.s32.totalorder %s17, 0
      %p135 = por %p133, %p134
      %p136 = scmp.ne.s32.totalorder %s128, %s130
      %p137 = scmp.eq.s32.totalorder %s22, 3
      %p138 = por %p136, %p137
      %p139 = scmp.ne.s32.totalorder %s130, %s131
      %p140 = scmp.eq.s32.totalorder %s22, 0
      %p141 = por %p139, %p140
      %p142 = scmp.ne.s32.totalorder %s130, %s131
      %p143 = scmp.eq.s32.totalorder %s23, 3
      %p144 = por %p142, %p143
      %p146 = scmp.ne.s32.totalorder %s131, %s145
      %p147 = scmp.eq.s32.totalorder %s23, 0
      %p148 = por %p146, %p147
      %s149 = ssub.s32 %s24, %s36
      %s150 = ssub.s32 %s25, %s32
      %s151 = sor.u32 %s149, %s150
      %p152 = scmp.eq.s32.totalorder %s151, 0
      %s154 = sadd.s32 %s153, 1
      %s155 = scalar_select %p152, %s153, %s154
      %p158 = pneg %p152
      %p159 = scmp.eq.s32.totalorder %s17, 3
      %p160 = por %p158, %p159
      %p161 = scmp.ne.s32.totalorder %s153, %s156
      %p162 = scmp.eq.s32.totalorder %s17, 0
      %p163 = por %p161, %p162
      %p164 = scmp.ne.s32.totalorder %s153, %s156
      %p165 = scmp.eq.s32.totalorder %s22, 3
      %p166 = por %p164, %p165
      %p167 = scmp.ne.s32.totalorder %s156, %s157
      %p168 = scmp.eq.s32.totalorder %s22, 0
      %p169 = por %p167, %p168
      %p170 = scmp.ne.s32.totalorder %s156, %s157
      %p171 = scmp.eq.s32.totalorder %s23, 3
      %p172 = por %p170, %p171
      %p174 = scmp.ne.s32.totalorder %s157, %s173
      %p175 = scmp.eq.s32.totalorder %s23, 0
      %p176 = por %p174, %p175
      %p177 = scmp.le.s32.totalorder 1, %s17
      %p178 = scmp.lt.s32.totalorder %s17, 5
      %p179 = pnand %p177, %p178
      %p180 = pneg %p179
      // Predicated region
      $region9: #{tpu_custom_call.1} parent=5 // pred_check
        _
      $region10: #{tpu_custom_call.1} parent=5 // pred_check_branch
        %182 = sbr.rel (%p179) target = $region12
      $region11: #{tpu_custom_call.1} parent=5 // pred_region
        %s183 = ssub.s32 %s17, 1
        // Predicated region
        $region13: #{tpu_custom_call.1} parent=11 // pred_check
          %p184 = pneg %p78
        $region14: #{tpu_custom_call.1} parent=11 // pred_check_branch
          %186 = sbr.rel (%p184) target = $region16
        $region15: #{tpu_custom_call.1} parent=11 // pred_region
          _
        $region16: #{tpu_custom_call.1} parent=11 // pred_fallthru
          _
        // Predicated region
        $region17: #{tpu_custom_call.1} parent=11 // pred_check
          %p187 = pneg %p99
        $region18: #{tpu_custom_call.1} parent=11 // pred_check_branch
          %189 = sbr.rel (%p187) target = $region20
        $region19: #{tpu_custom_call.1} parent=11 // pred_region
          _
        $region20: #{tpu_custom_call.1} parent=11 // pred_fallthru
          _
        // Predicated region
        $region21: #{tpu_custom_call.1} parent=11 // pred_check
          %p190 = pneg %p120
        $region22: #{tpu_custom_call.1} parent=11 // pred_check_branch
          %192 = sbr.rel (%p190) target = $region24
        $region23: #{tpu_custom_call.1} parent=11 // pred_region
          _
        $region24: #{tpu_custom_call.1} parent=11 // pred_fallthru
          _
        // Predicated region
        $region25: #{tpu_custom_call.1} parent=11 // pred_check
          %p193 = pneg %p141
        $region26: #{tpu_custom_call.1} parent=11 // pred_check_branch
          %195 = sbr.rel (%p193) target = $region28
        $region27: #{tpu_custom_call.1} parent=11 // pred_region
          _
        $region28: #{tpu_custom_call.1} parent=11 // pred_fallthru
          _
      $region12: #{tpu_custom_call.1} parent=5 // pred_fallthru
        _
      %p196 = scmp.lt.s32.totalorder %s17, 4
      // Predicated region
      $region29: #{tpu_custom_call.1} parent=5 // pred_check
        %p197 = pneg %p196
      $region30: #{tpu_custom_call.1} parent=5 // pred_check_branch
        %199 = sbr.rel (%p197) target = $region32
      $region31: #{tpu_custom_call.1} parent=5 // pred_region
        // Predicated region
        $region33: #{tpu_custom_call.1} parent=31 // pred_check
          %p200 = pneg %p51
        $region34: #{tpu_custom_call.1} parent=31 // pred_check_branch
          %202 = sbr.rel (%p200) target = $region36
        $region35: #{tpu_custom_call.1} parent=31 // pred_region
          %s203 = sand.u32 %s41, 1
          %s204 = scalar_lea.sflag [#allocation3], %s203
          %s205 = sand.u32 %s41, 1
          %s206 = smul.addr %s205, 72
          %s207 = scalar_lea.vmem [#allocation2], %s206
          %s209 = ssub.s32 1152, 1152
          %210 = vsyncadd %s204, %s209
          %s211 = smul.addr %s24, 36
          %s212 = sadd.s32 %s25, %s211
          %s213 = smul.addr %s212, 64
          %s214 = scalar_lea.hbm %s0, %s213
          %s215 = sshll.u32 %s207, 4
          %s216 = int_to_ptr.vmem [resolvable:$true] %s215
          %221 = dma.hbm_to_vmem [thread:$0]  %s214, 1152, %s216, %s204, 128, 64, 4
        $region36: #{tpu_custom_call.1} parent=31 // pred_fallthru
          _
      $region32: #{tpu_custom_call.1} parent=5 // pred_fallthru
        _
      %p222 = scmp.le.s32.totalorder 1, %s17
      %p223 = scmp.lt.s32.totalorder %s17, 5
      %p224 = pnand %p222, %p223
      %p225 = pneg %p224
      // Predicated region
      $region37: #{tpu_custom_call.1} parent=5 // pred_check
        _
      $region38: #{tpu_custom_call.1} parent=5 // pred_check_branch
        %227 = sbr.rel (%p224) target = $region40
      $region39: #{tpu_custom_call.1} parent=5 // pred_region
        %s228 = ssub.s32 %s17, 1
        %s229 = sand.u32 %s44, 1
        %s230 = scalar_lea.sflag [#allocation3], %s229
        %s231 = sand.u32 %s44, 1
        %s232 = smul.addr %s231, 72
        %s233 = scalar_lea.vmem [#allocation2], %s232
        // Predicated region
        $region41: #{tpu_custom_call.1} parent=39 // pred_check
          %p234 = pneg %p57
        $region42: #{tpu_custom_call.1} parent=39 // pred_check_branch
          %236 = sbr.rel (%p234) target = $region44
        $region43: #{tpu_custom_call.1} parent=39 // pred_region
          %237 = dma.done %s230, 1152
        $region44: #{tpu_custom_call.1} parent=39 // pred_fallthru
          _
        %s238 = sand.u32 %s44, 1
        %s239 = scalar_lea.sflag [#allocation3], %s238
        %s240 = sand.u32 %s44, 1
        %s241 = smul.addr %s240, 72
        %s242 = scalar_lea.vmem [#allocation2], %s241
        %p243 = pneg %p57
        %p244 = pneg %p54
        %p245 = pneg %p78
        %p246 = pneg %p75
        %p247 = pneg %p99
        %p248 = pneg %p96
        %p249 = pneg %p120
        %p250 = pneg %p117
        %p251 = pneg %p141
        %p252 = pneg %p138
        %p253 = pneg %p169
        %p254 = pneg %p166
        %s255 = sand.u32 %s156, 1
        %s256 = scalar_lea.sflag [#allocation4], %s255
        %s257 = sand.u32 %s156, 1
        %s258 = smul.addr %s257, 128
        %s259 = scalar_lea.vmem [#allocation5], %s258
        %v261 = vld [vmem:[%s233] sm:$0xf]
        %v262 = vld [vmem:[%s233 + $0x4] sm:$0xf]
        %v263 = vld [vmem:[%s233 + $0x8] sm:$0xf]
        %v264 = vld [vmem:[%s233 + $0xc] sm:$0xf]
        %v265 = vld [vmem:[%s233 + $0x10] sm:$0xf]
        %v266 = vld [vmem:[%s233 + $0x14] sm:$0xf]
        %v267 = vld [vmem:[%s233 + $0x18] sm:$0xf]
        %v268 = vld [vmem:[%s233 + $0x1c] sm:$0xf]
        %v269 = vld [vmem:[%s233 + $0x20] sm:$0xf]
        %v270 = vld [vmem:[%s233 + $0x24] sm:$0xf]
        %v271 = vld [vmem:[%s233 + $0x28] sm:$0xf]
        %v272 = vld [vmem:[%s233 + $0x2c] sm:$0xf]
        %v273 = vld [vmem:[%s233 + $0x30] sm:$0xf]
        %v274 = vld [vmem:[%s233 + $0x34] sm:$0xf]
        %v275 = vld [vmem:[%s233 + $0x38] sm:$0xf]
        %v276 = vld [vmem:[%s233 + $0x3c] sm:$0xf]
        %v277 = vld [vmem:[%s1] sm:$0xf]
        %v278 = vld [vmem:[%s1 + $0x4] sm:$0xf]
        %v279 = vld [vmem:[%s1 + $0x8] sm:$0xf]
        %v280 = vld [vmem:[%s1 + $0xc] sm:$0xf]
        %v281 = vld [vmem:[%s1 + $0x10] sm:$0xf]
        %v282 = vld [vmem:[%s1 + $0x14] sm:$0xf]
        %s283 = scalar_lea.vmem %s233, 4 [#allocation2]
        %v284 = vld [vmem:[%s283] sm:$0xf]
        %v285 = vld [vmem:[%s283 + $0x4] sm:$0xf]
        %v286 = vld [vmem:[%s283 + $0x8] sm:$0xf]
        %v287 = vld [vmem:[%s283 + $0xc] sm:$0xf]
        %v288 = vld [vmem:[%s283 + $0x10] sm:$0xf]
        %v289 = vld [vmem:[%s283 + $0x14] sm:$0xf]
        %v290 = vld [vmem:[%s283 + $0x18] sm:$0xf]
        %v291 = vld [vmem:[%s283 + $0x1c] sm:$0xf]
        %v292 = vld [vmem:[%s283 + $0x20] sm:$0xf]
        %v293 = vld [vmem:[%s283 + $0x24] sm:$0xf]
        %v294 = vld [vmem:[%s283 + $0x28] sm:$0xf]
        %v295 = vld [vmem:[%s283 + $0x2c] sm:$0xf]
        %v296 = vld [vmem:[%s283 + $0x30] sm:$0xf]
        %v297 = vld [vmem:[%s283 + $0x34] sm:$0xf]
        %v298 = vld [vmem:[%s283 + $0x38] sm:$0xf]
        %v299 = vld [vmem:[%s283 + $0x3c] sm:$0xf]
        %s300 = scalar_lea.vmem %s1, 24
        %v301 = vld [vmem:[%s300] sm:$0xf]
        %v302 = vld [vmem:[%s300 + $0x4] sm:$0xf]
        %v303 = vld [vmem:[%s300 + $0x8] sm:$0xf]
        %v304 = vld [vmem:[%s300 + $0xc] sm:$0xf]
        %v305 = vld [vmem:[%s300 + $0x10] sm:$0xf]
        %v306 = vld [vmem:[%s300 + $0x14] sm:$0xf]
        %v323 = vunpack.c.l.b16 %v284
        %v324 = vunpack.c.l.b16 %v285
        %v325 = vunpack.c.l.b16 %v286
        %v326 = vunpack.c.l.b16 %v287
        %v327 = vunpack.c.l.b16 %v288
        %v328 = vunpack.c.l.b16 %v289
        %v329 = vunpack.c.l.b16 %v290
        %v330 = vunpack.c.l.b16 %v291
        %v331 = vunpack.c.l.b16 %v292
        %v332 = vunpack.c.l.b16 %v293
        %v333 = vunpack.c.l.b16 %v294
        %v334 = vunpack.c.l.b16 %v295
        %v335 = vunpack.c.l.b16 %v296
        %v336 = vunpack.c.l.b16 %v297
        %v337 = vunpack.c.l.b16 %v298
        %v338 = vunpack.c.l.b16 %v299
        %v339 = vpack.c.b16 %v324, %v323
        %v340 = vpack.c.b16 %v326, %v325
        %v341 = vpack.c.b16 %v328, %v327
        %v342 = vpack.c.b16 %v330, %v329
        %v343 = vpack.c.b16 %v332, %v331
        %v344 = vpack.c.b16 %v334, %v333
        %v345 = vpack.c.b16 %v336, %v335
        %v346 = vpack.c.b16 %v338, %v337
        %v353 = vunpack.c.l.b16 %v301
        %v354 = vunpack.c.l.b16 %v302
        %v355 = vunpack.c.l.b16 %v303
        %v356 = vunpack.c.l.b16 %v304
        %v357 = vunpack.c.l.b16 %v305
        %v358 = vunpack.c.l.b16 %v306
        %v359 = vpack.c.b16 %v354, %v353
        %v360 = vpack.c.b16 %v356, %v355
        %v361 = vpack.c.b16 %v358, %v357
        %vm365 = vcmask 392192
        %v367 = vsel %vm365, %v339, 0
        %v370 = vsel %vm365, %v340, 0
        %v373 = vsel %vm365, %v341, 0
        %v376 = vsel %vm365, %v342, 0
        %v379 = vsel %vm365, %v343, 0
        %v382 = vsel %vm365, %v344, 0
        %v385 = vsel %vm365, %v345, 0
        %v388 = vsel %vm365, %v346, 0
        %390 = vmatprep.subr.bf16.mxu0 0
        %391 = vmatpush1.bf16.msra.mxu0 0
        %392 = vmatprep.subr.bf16.mxu0 0
        %393 = vmatpush1.bf16.msra.mxu0 0
        %394 = vmatprep.subr.bf16.mxu0 0
        %395 = vmatpush1.bf16.msra.mxu0 0
        %396 = vmatprep.subr.bf16.mxu0 0
        %397 = vmatpush1.bf16.msra.mxu0 0
        %398 = vmatprep.subr.bf16.mxu0 0
        %399 = vmatpush1.bf16.msra.mxu0 0
        %400 = vmatprep.subr.bf16.mxu0 0
        %401 = vmatpush1.bf16.msra.mxu0 %v361
        %402 = vmatprep.subr.bf16.mxu0 0
        %403 = vmatpush1.bf16.msra.mxu0 %v360
        %404 = vmatprep.subr.bf16.mxu0 0
        %405 = vmatpush1.bf16.msra.mxu0 %v359
        %406 = vmatprep.subr.bf16.mxu0 0
        %407 = vmatpush2.bf16.msra.mxu0 0
        %408 = vmatprep.subr.bf16.mxu0 0
        %409 = vmatpush2.bf16.msra.mxu0 0
        %410 = vmatprep.subr.bf16.mxu0 0
        %411 = vmatpush2.bf16.msra.mxu0 0
        %412 = vmatprep.subr.bf16.mxu0 0
        %413 = vmatpush2.bf16.msra.mxu0 0
        %414 = vmatprep.subr.bf16.mxu0 0
        %415 = vmatpush2.bf16.msra.mxu0 0
        %416 = vmatprep.subr.bf16.mxu0 0
        %417 = vmatpush2.bf16.msra.mxu0 0
        %418 = vmatprep.subr.bf16.mxu0 0
        %419 = vmatpush2.bf16.msra.mxu0 0
        %420 = vmatprep.subr.bf16.mxu0 0
        %421 = vmatpush2.bf16.msra.mxu0 0
        %422 = vmatprep.mubr.bf16.mxu0 0
        %423 = vmatmul.mubr.bf16.gmra.mxu0 %v367
        %v424 = vpop.f32.mrf.mxu0
        %v425 = vadd.f32 0.0, %v424
        %v426 = vpop.f32.mrf.mxu0
        %v427 = vpop.f32.mrf.mxu0
        %v428 = vadd.f32 0.0, %v427
        %v429 = vpop.f32.mrf.mxu0
        %430 = vmatprep.mubr.bf16.mxu0 0
        %431 = vmatmul.mubr.bf16.gmra.mxu0 %v370
        %v432 = vpop.f32.mrf.mxu0
        %v433 = vadd.f32 0.0, %v432
        %v434 = vpop.f32.mrf.mxu0
        %v435 = vpop.f32.mrf.mxu0
        %v436 = vadd.f32 0.0, %v435
        %v437 = vpop.f32.mrf.mxu0
        %438 = vmatprep.mubr.bf16.mxu0 0
        %439 = vmatmul.mubr.bf16.gmra.mxu0 %v373
        %v440 = vpop.f32.mrf.mxu0
        %v441 = vadd.f32 0.0, %v440
        %v442 = vpop.f32.mrf.mxu0
        %v443 = vpop.f32.mrf.mxu0
        %v444 = vadd.f32 0.0, %v443
        %v445 = vpop.f32.mrf.mxu0
        %446 = vmatprep.mubr.bf16.mxu0 0
        %447 = vmatmul.mubr.bf16.gmra.mxu0 %v376
        %v448 = vpop.f32.mrf.mxu0
        %v449 = vadd.f32 0.0, %v448
        %v450 = vpop.f32.mrf.mxu0
        %v451 = vpop.f32.mrf.mxu0
        %v452 = vadd.f32 0.0, %v451
        %v453 = vpop.f32.mrf.mxu0
        %454 = vmatprep.mubr.bf16.mxu0 0
        %455 = vmatmul.mubr.bf16.gmra.mxu0 %v379
        %v456 = vpop.f32.mrf.mxu0
        %v457 = vadd.f32 0.0, %v456
        %v458 = vpop.f32.mrf.mxu0
        %v459 = vpop.f32.mrf.mxu0
        %v460 = vadd.f32 0.0, %v459
        %v461 = vpop.f32.mrf.mxu0
        %462 = vmatprep.mubr.bf16.mxu0 0
        %463 = vmatmul.mubr.bf16.gmra.mxu0 %v382
        %v464 = vpop.f32.mrf.mxu0
        %v465 = vadd.f32 0.0, %v464
        %v466 = vpop.f32.mrf.mxu0
        %v467 = vpop.f32.mrf.mxu0
        %v468 = vadd.f32 0.0, %v467
        %v469 = vpop.f32.mrf.mxu0
        %470 = vmatprep.mubr.bf16.mxu0 0
        %471 = vmatmul.mubr.bf16.gmra.mxu0 %v385
        %v472 = vpop.f32.mrf.mxu0
        %v473 = vadd.f32 0.0, %v472
        %v474 = vpop.f32.mrf.mxu0
        %v475 = vpop.f32.mrf.mxu0
        %v476 = vadd.f32 0.0, %v475
        %v477 = vpop.f32.mrf.mxu0
        %478 = vmatprep.mubr.bf16.mxu0 0
        %479 = vmatmul.mubr.bf16.gmra.mxu0 %v388
        %v480 = vpop.f32.mrf.mxu0
        %v481 = vadd.f32 0.0, %v480
        %v482 = vpop.f32.mrf.mxu0
        %v483 = vpop.f32.mrf.mxu0
        %v484 = vadd.f32 0.0, %v483
        %v485 = vpop.f32.mrf.mxu0
        %486 = vdwg.mxu0
        %v503 = vunpack.c.l.b16 %v261
        %v504 = vunpack.c.l.b16 %v262
        %v505 = vunpack.c.l.b16 %v263
        %v506 = vunpack.c.l.b16 %v264
        %v507 = vunpack.c.l.b16 %v265
        %v508 = vunpack.c.l.b16 %v266
        %v509 = vunpack.c.l.b16 %v267
        %v510 = vunpack.c.l.b16 %v268
        %v511 = vunpack.c.l.b16 %v269
        %v512 = vunpack.c.l.b16 %v270
        %v513 = vunpack.c.l.b16 %v271
        %v514 = vunpack.c.l.b16 %v272
        %v515 = vunpack.c.l.b16 %v273
        %v516 = vunpack.c.l.b16 %v274
        %v517 = vunpack.c.l.b16 %v275
        %v518 = vunpack.c.l.b16 %v276
        %v519 = vpack.c.b16 %v504, %v503
        %v520 = vpack.c.b16 %v506, %v505
        %v521 = vpack.c.b16 %v508, %v507
        %v522 = vpack.c.b16 %v510, %v509
        %v523 = vpack.c.b16 %v512, %v511
        %v524 = vpack.c.b16 %v514, %v513
        %v525 = vpack.c.b16 %v516, %v515
        %v526 = vpack.c.b16 %v518, %v517
        %v533 = vunpack.c.l.b16 %v277
        %v534 = vunpack.c.l.b16 %v278
        %v535 = vunpack.c.l.b16 %v279
        %v536 = vunpack.c.l.b16 %v280
        %v537 = vunpack.c.l.b16 %v281
        %v538 = vunpack.c.l.b16 %v282
        %v539 = vpack.c.b16 %v534, %v533
        %v540 = vpack.c.b16 %v536, %v535
        %v541 = vpack.c.b16 %v538, %v537
        %v546 = vsel %vm365, %v519, 0
        %v549 = vsel %vm365, %v520, 0
        %v552 = vsel %vm365, %v521, 0
        %v555 = vsel %vm365, %v522, 0
        %v558 = vsel %vm365, %v523, 0
        %v561 = vsel %vm365, %v524, 0
        %v564 = vsel %vm365, %v525, 0
        %v567 = vsel %vm365, %v526, 0
        %569 = vmatprep.subr.bf16.mxu0 0
        %570 = vmatpush1.bf16.msra.mxu0 0
        %571 = vmatprep.subr.bf16.mxu0 0
        %572 = vmatpush1.bf16.msra.mxu0 0
        %573 = vmatprep.subr.bf16.mxu0 0
        %574 = vmatpush1.bf16.msra.mxu0 0
        %575 = vmatprep.subr.bf16.mxu0 0
        %576 = vmatpush1.bf16.msra.mxu0 0
        %577 = vmatprep.subr.bf16.mxu0 0
        %578 = vmatpush1.bf16.msra.mxu0 0
        %579 = vmatprep.subr.bf16.mxu0 0
        %580 = vmatpush1.bf16.msra.mxu0 %v541
        %581 = vmatprep.subr.bf16.mxu0 0
        %582 = vmatpush1.bf16.msra.mxu0 %v540
        %583 = vmatprep.subr.bf16.mxu0 0
        %584 = vmatpush1.bf16.msra.mxu0 %v539
        %585 = vmatprep.subr.bf16.mxu0 0
        %586 = vmatpush2.bf16.msra.mxu0 0
        %587 = vmatprep.subr.bf16.mxu0 0
        %588 = vmatpush2.bf16.msra.mxu0 0
        %589 = vmatprep.subr.bf16.mxu0 0
        %590 = vmatpush2.bf16.msra.mxu0 0
        %591 = vmatprep.subr.bf16.mxu0 0
        %592 = vmatpush2.bf16.msra.mxu0 0
        %593 = vmatprep.subr.bf16.mxu0 0
        %594 = vmatpush2.bf16.msra.mxu0 0
        %595 = vmatprep.subr.bf16.mxu0 0
        %596 = vmatpush2.bf16.msra.mxu0 0
        %597 = vmatprep.subr.bf16.mxu0 0
        %598 = vmatpush2.bf16.msra.mxu0 0
        %599 = vmatprep.subr.bf16.mxu0 0
        %600 = vmatpush2.bf16.msra.mxu0 0
        %601 = vmatprep.mubr.bf16.mxu0 0
        %602 = vmatmul.mubr.bf16.gmra.mxu0 %v546
        %v603 = vpop.f32.mrf.mxu0
        %v604 = vadd.f32 %v425, %v603
        %v605 = vpop.f32.mrf.mxu0
        %v606 = vpop.f32.mrf.mxu0
        %v607 = vadd.f32 %v428, %v606
        %v608 = vpop.f32.mrf.mxu0
        %609 = vmatprep.mubr.bf16.mxu0 0
        %610 = vmatmul.mubr.bf16.gmra.mxu0 %v549
        %v611 = vpop.f32.mrf.mxu0
        %v612 = vadd.f32 %v433, %v611
        %v613 = vpop.f32.mrf.mxu0
        %v614 = vpop.f32.mrf.mxu0
        %v615 = vadd.f32 %v436, %v614
        %v616 = vpop.f32.mrf.mxu0
        %617 = vmatprep.mubr.bf16.mxu0 0
        %618 = vmatmul.mubr.bf16.gmra.mxu0 %v552
        %v619 = vpop.f32.mrf.mxu0
        %v620 = vadd.f32 %v441, %v619
        %v621 = vpop.f32.mrf.mxu0
        %v622 = vpop.f32.mrf.mxu0
        %v623 = vadd.f32 %v444, %v622
        %v624 = vpop.f32.mrf.mxu0
        %625 = vmatprep.mubr.bf16.mxu0 0
        %626 = vmatmul.mubr.bf16.gmra.mxu0 %v555
        %v627 = vpop.f32.mrf.mxu0
        %v628 = vadd.f32 %v449, %v627
        %v629 = vpop.f32.mrf.mxu0
        %v630 = vpop.f32.mrf.mxu0
        %v631 = vadd.f32 %v452, %v630
        %v632 = vpop.f32.mrf.mxu0
        %633 = vmatprep.mubr.bf16.mxu0 0
        %634 = vmatmul.mubr.bf16.gmra.mxu0 %v558
        %v635 = vpop.f32.mrf.mxu0
        %v636 = vadd.f32 %v457, %v635
        %v637 = vpop.f32.mrf.mxu0
        %v638 = vpop.f32.mrf.mxu0
        %v639 = vadd.f32 %v460, %v638
        %v640 = vpop.f32.mrf.mxu0
        %641 = vmatprep.mubr.bf16.mxu0 0
        %642 = vmatmul.mubr.bf16.gmra.mxu0 %v561
        %v643 = vpop.f32.mrf.mxu0
        %v644 = vadd.f32 %v465, %v643
        %v645 = vpop.f32.mrf.mxu0
        %v646 = vpop.f32.mrf.mxu0
        %v647 = vadd.f32 %v468, %v646
        %v648 = vpop.f32.mrf.mxu0
        %649 = vmatprep.mubr.bf16.mxu0 0
        %650 = vmatmul.mubr.bf16.gmra.mxu0 %v564
        %v651 = vpop.f32.mrf.mxu0
        %v652 = vadd.f32 %v473, %v651
        %v653 = vpop.f32.mrf.mxu0
        %v654 = vpop.f32.mrf.mxu0
        %v655 = vadd.f32 %v476, %v654
        %v656 = vpop.f32.mrf.mxu0
        %657 = vmatprep.mubr.bf16.mxu0 0
        %658 = vmatmul.mubr.bf16.gmra.mxu0 %v567
        %v659 = vpop.f32.mrf.mxu0
        %v660 = vadd.f32 %v481, %v659
        %v661 = vpop.f32.mrf.mxu0
        %v662 = vpop.f32.mrf.mxu0
        %v663 = vadd.f32 %v484, %v662
        %v664 = vpop.f32.mrf.mxu0
        %665 = vdwg.mxu0
        %s666 = scalar_lea.vmem %s233, 8 [#allocation2]
        %v667 = vld [vmem:[%s666] sm:$0xf]
        %v668 = vld [vmem:[%s666 + $0x4] sm:$0xf]
        %v669 = vld [vmem:[%s666 + $0x8] sm:$0xf]
        %v670 = vld [vmem:[%s666 + $0xc] sm:$0xf]
        %v671 = vld [vmem:[%s666 + $0x10] sm:$0xf]
        %v672 = vld [vmem:[%s666 + $0x14] sm:$0xf]
        %v673 = vld [vmem:[%s666 + $0x18] sm:$0xf]
        %v674 = vld [vmem:[%s666 + $0x1c] sm:$0xf]
        %v675 = vld [vmem:[%s666 + $0x20] sm:$0xf]
        %v676 = vld [vmem:[%s666 + $0x24] sm:$0xf]
        %v677 = vld [vmem:[%s666 + $0x28] sm:$0xf]
        %v678 = vld [vmem:[%s666 + $0x2c] sm:$0xf]
        %v679 = vld [vmem:[%s666 + $0x30] sm:$0xf]
        %v680 = vld [vmem:[%s666 + $0x34] sm:$0xf]
        %v681 = vld [vmem:[%s666 + $0x38] sm:$0xf]
        %v682 = vld [vmem:[%s666 + $0x3c] sm:$0xf]
        %s683 = scalar_lea.vmem %s1, 48
        %v684 = vld [vmem:[%s683] sm:$0xf]
        %v685 = vld [vmem:[%s683 + $0x4] sm:$0xf]
        %v686 = vld [vmem:[%s683 + $0x8] sm:$0xf]
        %v687 = vld [vmem:[%s683 + $0xc] sm:$0xf]
        %v688 = vld [vmem:[%s683 + $0x10] sm:$0xf]
        %v689 = vld [vmem:[%s683 + $0x14] sm:$0xf]
        %v706 = vunpack.c.l.b16 %v667
        %v707 = vunpack.c.l.b16 %v668
        %v708 = vunpack.c.l.b16 %v669
        %v709 = vunpack.c.l.b16 %v670
        %v710 = vunpack.c.l.b16 %v671
        %v711 = vunpack.c.l.b16 %v672
        %v712 = vunpack.c.l.b16 %v673
        %v713 = vunpack.c.l.b16 %v674
        %v714 = vunpack.c.l.b16 %v675
        %v715 = vunpack.c.l.b16 %v676
        %v716 = vunpack.c.l.b16 %v677
        %v717 = vunpack.c.l.b16 %v678
        %v718 = vunpack.c.l.b16 %v679
        %v719 = vunpack.c.l.b16 %v680
        %v720 = vunpack.c.l.b16 %v681
        %v721 = vunpack.c.l.b16 %v682
        %v722 = vpack.c.b16 %v707, %v706
        %v723 = vpack.c.b16 %v709, %v708
        %v724 = vpack.c.b16 %v711, %v710
        %v725 = vpack.c.b16 %v713, %v712
        %v726 = vpack.c.b16 %v715, %v714
        %v727 = vpack.c.b16 %v717, %v716
        %v728 = vpack.c.b16 %v719, %v718
        %v729 = vpack.c.b16 %v721, %v720
        %v736 = vunpack.c.l.b16 %v684
        %v737 = vunpack.c.l.b16 %v685
        %v738 = vunpack.c.l.b16 %v686
        %v739 = vunpack.c.l.b16 %v687
        %v740 = vunpack.c.l.b16 %v688
        %v741 = vunpack.c.l.b16 %v689
        %v742 = vpack.c.b16 %v737, %v736
        %v743 = vpack.c.b16 %v739, %v738
        %v744 = vpack.c.b16 %v741, %v740
        %v749 = vsel %vm365, %v722, 0
        %v752 = vsel %vm365, %v723, 0
        %v755 = vsel %vm365, %v724, 0
        %v758 = vsel %vm365, %v725, 0
        %v761 = vsel %vm365, %v726, 0
        %v764 = vsel %vm365, %v727, 0
        %v767 = vsel %vm365, %v728, 0
        %v770 = vsel %vm365, %v729, 0
        %772 = vmatprep.subr.bf16.mxu0 0
        %773 = vmatpush1.bf16.msra.mxu0 0
        %774 = vmatprep.subr.bf16.mxu0 0
        %775 = vmatpush1.bf16.msra.mxu0 0
        %776 = vmatprep.subr.bf16.mxu0 0
        %777 = vmatpush1.bf16.msra.mxu0 0
        %778 = vmatprep.subr.bf16.mxu0 0
        %779 = vmatpush1.bf16.msra.mxu0 0
        %780 = vmatprep.subr.bf16.mxu0 0
        %781 = vmatpush1.bf16.msra.mxu0 0
        %782 = vmatprep.subr.bf16.mxu0 0
        %783 = vmatpush1.bf16.msra.mxu0 %v744
        %784 = vmatprep.subr.bf16.mxu0 0
        %785 = vmatpush1.bf16.msra.mxu0 %v743
        %786 = vmatprep.subr.bf16.mxu0 0
        %787 = vmatpush1.bf16.msra.mxu0 %v742
        %788 = vmatprep.subr.bf16.mxu0 0
        %789 = vmatpush2.bf16.msra.mxu0 0
        %790 = vmatprep.subr.bf16.mxu0 0
        %791 = vmatpush2.bf16.msra.mxu0 0
        %792 = vmatprep.subr.bf16.mxu0 0
        %793 = vmatpush2.bf16.msra.mxu0 0
        %794 = vmatprep.subr.bf16.mxu0 0
        %795 = vmatpush2.bf16.msra.mxu0 0
        %796 = vmatprep.subr.bf16.mxu0 0
        %797 = vmatpush2.bf16.msra.mxu0 0
        %798 = vmatprep.subr.bf16.mxu0 0
        %799 = vmatpush2.bf16.msra.mxu0 0
        %800 = vmatprep.subr.bf16.mxu0 0
        %801 = vmatpush2.bf16.msra.mxu0 0
        %802 = vmatprep.subr.bf16.mxu0 0
        %803 = vmatpush2.bf16.msra.mxu0 0
        %804 = vmatprep.mubr.bf16.mxu0 0
        %805 = vmatmul.mubr.bf16.gmra.mxu0 %v749
        %v806 = vpop.f32.mrf.mxu0
        %v807 = vadd.f32 0.0, %v806
        %v808 = vpop.f32.mrf.mxu0
        %v809 = vpop.f32.mrf.mxu0
        %v810 = vadd.f32 0.0, %v809
        %v811 = vpop.f32.mrf.mxu0
        %812 = vmatprep.mubr.bf16.mxu0 0
        %813 = vmatmul.mubr.bf16.gmra.mxu0 %v752
        %v814 = vpop.f32.mrf.mxu0
        %v815 = vadd.f32 0.0, %v814
        %v816 = vpop.f32.mrf.mxu0
        %v817 = vpop.f32.mrf.mxu0
        %v818 = vadd.f32 0.0, %v817
        %v819 = vpop.f32.mrf.mxu0
        %820 = vmatprep.mubr.bf16.mxu0 0
        %821 = vmatmul.mubr.bf16.gmra.mxu0 %v755
        %v822 = vpop.f32.mrf.mxu0
        %v823 = vadd.f32 0.0, %v822
        %v824 = vpop.f32.mrf.mxu0
        %v825 = vpop.f32.mrf.mxu0
        %v826 = vadd.f32 0.0, %v825
        %v827 = vpop.f32.mrf.mxu0
        %828 = vmatprep.mubr.bf16.mxu0 0
        %829 = vmatmul.mubr.bf16.gmra.mxu0 %v758
        %v830 = vpop.f32.mrf.mxu0
        %v831 = vadd.f32 0.0, %v830
        %v832 = vpop.f32.mrf.mxu0
        %v833 = vpop.f32.mrf.mxu0
        %v834 = vadd.f32 0.0, %v833
        %v835 = vpop.f32.mrf.mxu0
        %836 = vmatprep.mubr.bf16.mxu0 0
        %837 = vmatmul.mubr.bf16.gmra.mxu0 %v761
        %v838 = vpop.f32.mrf.mxu0
        %v839 = vadd.f32 0.0, %v838
        %v840 = vpop.f32.mrf.mxu0
        %v841 = vpop.f32.mrf.mxu0
        %v842 = vadd.f32 0.0, %v841
        %v843 = vpop.f32.mrf.mxu0
        %844 = vmatprep.mubr.bf16.mxu0 0
        %845 = vmatmul.mubr.bf16.gmra.mxu0 %v764
        %v846 = vpop.f32.mrf.mxu0
        %v847 = vadd.f32 0.0, %v846
        %v848 = vpop.f32.mrf.mxu0
        %v849 = vpop.f32.mrf.mxu0
        %v850 = vadd.f32 0.0, %v849
        %v851 = vpop.f32.mrf.mxu0
        %852 = vmatprep.mubr.bf16.mxu0 0
        %853 = vmatmul.mubr.bf16.gmra.mxu0 %v767
        %v854 = vpop.f32.mrf.mxu0
        %v855 = vadd.f32 0.0, %v854
        %v856 = vpop.f32.mrf.mxu0
        %v857 = vpop.f32.mrf.mxu0
        %v858 = vadd.f32 0.0, %v857
        %v859 = vpop.f32.mrf.mxu0
        %860 = vmatprep.mubr.bf16.mxu0 0
        %861 = vmatmul.mubr.bf16.gmra.mxu0 %v770
        %v862 = vpop.f32.mrf.mxu0
        %v863 = vadd.f32 0.0, %v862
        %v864 = vpop.f32.mrf.mxu0
        %v865 = vpop.f32.mrf.mxu0
        %v866 = vadd.f32 0.0, %v865
        %v867 = vpop.f32.mrf.mxu0
        %868 = vdwg.mxu0
        %v869 = vadd.f32 %v604, %v807
        %v870 = vadd.f32 %v607, %v810
        %v871 = vadd.f32 %v612, %v815
        %v872 = vadd.f32 %v615, %v818
        %v873 = vadd.f32 %v620, %v823
        %v874 = vadd.f32 %v623, %v826
        %v875 = vadd.f32 %v628, %v831
        %v876 = vadd.f32 %v631, %v834
        %v877 = vadd.f32 %v636, %v839
        %v878 = vadd.f32 %v639, %v842
        %v879 = vadd.f32 %v644, %v847
        %v880 = vadd.f32 %v647, %v850
        %v881 = vadd.f32 %v652, %v855
        %v882 = vadd.f32 %v655, %v858
        %v883 = vadd.f32 %v660, %v863
        %v884 = vadd.f32 %v663, %v866
        %v885 = vld [vmem:[%s2] sm:$0x1]
        %v887 = vlaneseq
        %v888 = vshrl.u32 %v887, 7
        %v889 = vsub.s32 0, %v888
        %v890 = vrot.slane %v885, %v889
        %v892 = vadd.f32 %v869, %v890
        %v893 = vadd.f32 %v870, %v890
        %v894 = vadd.f32 %v871, %v890
        %v895 = vadd.f32 %v872, %v890
        %v896 = vadd.f32 %v873, %v890
        %v897 = vadd.f32 %v874, %v890
        %v898 = vadd.f32 %v875, %v890
        %v899 = vadd.f32 %v876, %v890
        %v900 = vadd.f32 %v877, %v890
        %v901 = vadd.f32 %v878, %v890
        %v902 = vadd.f32 %v879, %v890
        %v903 = vadd.f32 %v880, %v890
        %v904 = vadd.f32 %v881, %v890
        %v905 = vadd.f32 %v882, %v890
        %v906 = vadd.f32 %v883, %v890
        %v907 = vadd.f32 %v884, %v890
        %v908 = vmax.f32 %v892, 0.0
        %v909 = vmax.f32 %v893, 0.0
        %v910 = vmax.f32 %v894, 0.0
        %v911 = vmax.f32 %v895, 0.0
        %v912 = vmax.f32 %v896, 0.0
        %v913 = vmax.f32 %v897, 0.0
        %v914 = vmax.f32 %v898, 0.0
        %v915 = vmax.f32 %v899, 0.0
        %v916 = vmax.f32 %v900, 0.0
        %v917 = vmax.f32 %v901, 0.0
        %v918 = vmax.f32 %v902, 0.0
        %v919 = vmax.f32 %v903, 0.0
        %v920 = vmax.f32 %v904, 0.0
        %v921 = vmax.f32 %v905, 0.0
        %v922 = vmax.f32 %v906, 0.0
        %v923 = vmax.f32 %v907, 0.0
        %v924 = vpack.c.bf16 %v909, %v908
        %v925 = vpack.c.bf16 %v911, %v910
        %v926 = vpack.c.bf16 %v913, %v912
        %v927 = vpack.c.bf16 %v915, %v914
        %v928 = vpack.c.bf16 %v917, %v916
        %v929 = vpack.c.bf16 %v919, %v918
        %v930 = vpack.c.bf16 %v921, %v920
        %v931 = vpack.c.bf16 %v923, %v922
        %v932 = vld [vmem:[%s3] sm:$0xf]
        %v933 = vld [vmem:[%s3 + $0x4] sm:$0xf]
        %v934 = vld [vmem:[%s3 + $0x8] sm:$0xf]
        %v935 = vld [vmem:[%s3 + $0xc] sm:$0xf]
        %v936 = vld [vmem:[%s4] sm:$0x1]
        %v938 = vlaneseq
        %v939 = vshrl.u32 %v938, 7
        %v940 = vsub.s32 0, %v939
        %v941 = vrot.slane %v936, %v940
        %v947 = vunpack.c.l.b16 %v932
        %v948 = vunpack.c.l.b16 %v933
        %v949 = vunpack.c.l.b16 %v934
        %v950 = vunpack.c.l.b16 %v935
        %v951 = vpack.c.b16 %v948, %v947
        %v952 = vpack.c.b16 %v950, %v949
        %vm955 = vcmask 261120
        %v957 = vsel %vm955, %v924, 0
        %v960 = vsel %vm955, %v925, 0
        %v963 = vsel %vm955, %v926, 0
        %v966 = vsel %vm955, %v927, 0
        %v969 = vsel %vm955, %v928, 0
        %v972 = vsel %vm955, %v929, 0
        %v975 = vsel %vm955, %v930, 0
        %v978 = vsel %vm955, %v931, 0
        %980 = vmatprep.subr.bf16.mxu0 0
        %981 = vmatpush1.bf16.msra.mxu0 0
        %982 = vmatprep.subr.bf16.mxu0 0
        %983 = vmatpush1.bf16.msra.mxu0 0
        %984 = vmatprep.subr.bf16.mxu0 0
        %985 = vmatpush1.bf16.msra.mxu0 0
        %986 = vmatprep.subr.bf16.mxu0 0
        %987 = vmatpush1.bf16.msra.mxu0 0
        %988 = vmatprep.subr.bf16.mxu0 0
        %989 = vmatpush1.bf16.msra.mxu0 0
        %990 = vmatprep.subr.bf16.mxu0 0
        %991 = vmatpush1.bf16.msra.mxu0 0
        %992 = vmatprep.subr.bf16.mxu0 0
        %993 = vmatpush1.bf16.msra.mxu0 %v952
        %994 = vmatprep.subr.bf16.mxu0 0
        %995 = vmatpush1.bf16.msra.mxu0 %v951
        %996 = vmatprep.subr.bf16.mxu0 0
        %997 = vmatpush2.bf16.msra.mxu0 0
        %998 = vmatprep.subr.bf16.mxu0 0
        %999 = vmatpush2.bf16.msra.mxu0 0
        %1000 = vmatprep.subr.bf16.mxu0 0
        %1001 = vmatpush2.bf16.msra.mxu0 0
        %1002 = vmatprep.subr.bf16.mxu0 0
        %1003 = vmatpush2.bf16.msra.mxu0 0
        %1004 = vmatprep.subr.bf16.mxu0 0
        %1005 = vmatpush2.bf16.msra.mxu0 0
        %1006 = vmatprep.subr.bf16.mxu0 0
        %1007 = vmatpush2.bf16.msra.mxu0 0
        %1008 = vmatprep.subr.bf16.mxu0 0
        %1009 = vmatpush2.bf16.msra.mxu0 0
        %1010 = vmatprep.subr.bf16.mxu0 0
        %1011 = vmatpush2.bf16.msra.mxu0 0
        %1012 = vmatprep.mubr.bf16.mxu0 0
        %1013 = vmatmul.mubr.bf16.gmra.mxu0 %v957
        %v1014 = vpop.f32.mrf.mxu0
        %v1015 = vadd.f32 %v941, %v1014
        %v1016 = vpop.f32.mrf.mxu0
        %v1017 = vpop.f32.mrf.mxu0
        %v1018 = vadd.f32 %v941, %v1017
        %v1019 = vpop.f32.mrf.mxu0
        %1020 = vmatprep.mubr.bf16.mxu0 0
        %1021 = vmatmul.mubr.bf16.gmra.mxu0 %v960
        %v1022 = vpop.f32.mrf.mxu0
        %v1023 = vadd.f32 %v941, %v1022
        %v1024 = vpop.f32.mrf.mxu0
        %v1025 = vpop.f32.mrf.mxu0
        %v1026 = vadd.f32 %v941, %v1025
        %v1027 = vpop.f32.mrf.mxu0
        %1028 = vmatprep.mubr.bf16.mxu0 0
        %1029 = vmatmul.mubr.bf16.gmra.mxu0 %v963
        %v1030 = vpop.f32.mrf.mxu0
        %v1031 = vadd.f32 %v941, %v1030
        %v1032 = vpop.f32.mrf.mxu0
        %v1033 = vpop.f32.mrf.mxu0
        %v1034 = vadd.f32 %v941, %v1033
        %v1035 = vpop.f32.mrf.mxu0
        %1036 = vmatprep.mubr.bf16.mxu0 0
        %1037 = vmatmul.mubr.bf16.gmra.mxu0 %v966
        %v1038 = vpop.f32.mrf.mxu0
        %v1039 = vadd.f32 %v941, %v1038
        %v1040 = vpop.f32.mrf.mxu0
        %v1041 = vpop.f32.mrf.mxu0
        %v1042 = vadd.f32 %v941, %v1041
        %v1043 = vpop.f32.mrf.mxu0
        %1044 = vmatprep.mubr.bf16.mxu0 0
        %1045 = vmatmul.mubr.bf16.gmra.mxu0 %v969
        %v1046 = vpop.f32.mrf.mxu0
        %v1047 = vadd.f32 %v941, %v1046
        %v1048 = vpop.f32.mrf.mxu0
        %v1049 = vpop.f32.mrf.mxu0
        %v1050 = vadd.f32 %v941, %v1049
        %v1051 = vpop.f32.mrf.mxu0
        %1052 = vmatprep.mubr.bf16.mxu0 0
        %1053 = vmatmul.mubr.bf16.gmra.mxu0 %v972
        %v1054 = vpop.f32.mrf.mxu0
        %v1055 = vadd.f32 %v941, %v1054
        %v1056 = vpop.f32.mrf.mxu0
        %v1057 = vpop.f32.mrf.mxu0
        %v1058 = vadd.f32 %v941, %v1057
        %v1059 = vpop.f32.mrf.mxu0
        %1060 = vmatprep.mubr.bf16.mxu0 0
        %1061 = vmatmul.mubr.bf16.gmra.mxu0 %v975
        %v1062 = vpop.f32.mrf.mxu0
        %v1063 = vadd.f32 %v941, %v1062
        %v1064 = vpop.f32.mrf.mxu0
        %v1065 = vpop.f32.mrf.mxu0
        %v1066 = vadd.f32 %v941, %v1065
        %v1067 = vpop.f32.mrf.mxu0
        %1068 = vmatprep.mubr.bf16.mxu0 0
        %1069 = vmatmul.mubr.bf16.gmra.mxu0 %v978
        %v1070 = vpop.f32.mrf.mxu0
        %v1071 = vadd.f32 %v941, %v1070
        %v1072 = vpop.f32.mrf.mxu0
        %v1073 = vpop.f32.mrf.mxu0
        %v1074 = vadd.f32 %v941, %v1073
        %v1075 = vpop.f32.mrf.mxu0
        %1076 = vdwg.mxu0
        %v1077 = vmul.f32 %v1015, 1.442695
        %v1078 = vpow.pop %v1077
        %v1079 = vmul.f32 %v1018, 1.442695
        %v1080 = vpow.pop %v1079
        %v1081 = vmul.f32 %v1023, 1.442695
        %v1082 = vpow.pop %v1081
        %v1083 = vmul.f32 %v1026, 1.442695
        %v1084 = vpow.pop %v1083
        %v1085 = vmul.f32 %v1031, 1.442695
        %v1086 = vpow.pop %v1085
        %v1087 = vmul.f32 %v1034, 1.442695
        %v1088 = vpow.pop %v1087
        %v1089 = vmul.f32 %v1039, 1.442695
        %v1090 = vpow.pop %v1089
        %v1091 = vmul.f32 %v1042, 1.442695
        %v1092 = vpow.pop %v1091
        %v1093 = vmul.f32 %v1047, 1.442695
        %v1094 = vpow.pop %v1093
        %v1095 = vmul.f32 %v1050, 1.442695
        %v1096 = vpow.pop %v1095
        %v1097 = vmul.f32 %v1055, 1.442695
        %v1098 = vpow.pop %v1097
        %v1099 = vmul.f32 %v1058, 1.442695
        %v1100 = vpow.pop %v1099
        %v1101 = vmul.f32 %v1063, 1.442695
        %v1102 = vpow.pop %v1101
        %v1103 = vmul.f32 %v1066, 1.442695
        %v1104 = vpow.pop %v1103
        %v1105 = vmul.f32 %v1071, 1.442695
        %v1106 = vpow.pop %v1105
        %v1107 = vmul.f32 %v1074, 1.442695
        %v1108 = vpow.pop %v1107
        %v1109 = vadd.f32 %v1078, 1.0
        %v1110 = vadd.f32 %v1080, 1.0
        %v1111 = vadd.f32 %v1082, 1.0
        %v1112 = vadd.f32 %v1084, 1.0
        %v1113 = vadd.f32 %v1086, 1.0
        %v1114 = vadd.f32 %v1088, 1.0
        %v1115 = vadd.f32 %v1090, 1.0
        %v1116 = vadd.f32 %v1092, 1.0
        %v1117 = vadd.f32 %v1094, 1.0
        %v1118 = vadd.f32 %v1096, 1.0
        %v1119 = vadd.f32 %v1098, 1.0
        %v1120 = vadd.f32 %v1100, 1.0
        %v1121 = vadd.f32 %v1102, 1.0
        %v1122 = vadd.f32 %v1104, 1.0
        %v1123 = vadd.f32 %v1106, 1.0
        %v1124 = vadd.f32 %v1108, 1.0
        %v1125 = vrcp.pop %v1109
        %v1126 = vrcp.pop %v1110
        %v1127 = vrcp.pop %v1111
        %v1128 = vrcp.pop %v1112
        %v1129 = vrcp.pop %v1113
        %v1130 = vrcp.pop %v1114
        %v1131 = vrcp.pop %v1115
        %v1132 = vrcp.pop %v1116
        %v1133 = vrcp.pop %v1117
        %v1134 = vrcp.pop %v1118
        %v1135 = vrcp.pop %v1119
        %v1136 = vrcp.pop %v1120
        %v1137 = vrcp.pop %v1121
        %v1138 = vrcp.pop %v1122
        %v1139 = vrcp.pop %v1123
        %v1140 = vrcp.pop %v1124
        %v1141 = vlaneseq
        %v1142 = vand.u32 %v1141, 127
        %vm1143 = vcmp.ge.s32.totalorder %v1142, 54
        %vm1144 = vcmp.lt.s32.totalorder %v1142, 63
        %vm1145 = vmand %vm1143, %vm1144
        %v1146 = vsel %vm1145, %v1125, %v1015
        %v1147 = vsel %vm1145, %v1126, %v1018
        %v1148 = vsel %vm1145, %v1127, %v1023
        %v1149 = vsel %vm1145, %v1128, %v1026
        %v1150 = vsel %vm1145, %v1129, %v1031
        %v1151 = vsel %vm1145, %v1130, %v1034
        %v1152 = vsel %vm1145, %v1131, %v1039
        %v1153 = vsel %vm1145, %v1132, %v1042
        %v1154 = vsel %vm1145, %v1133, %v1047
        %v1155 = vsel %vm1145, %v1134, %v1050
        %v1156 = vsel %vm1145, %v1135, %v1055
        %v1157 = vsel %vm1145, %v1136, %v1058
        %v1158 = vsel %vm1145, %v1137, %v1063
        %v1159 = vsel %vm1145, %v1138, %v1066
        %v1160 = vsel %vm1145, %v1139, %v1071
        %v1161 = vsel %vm1145, %v1140, %v1074
        %1162 = vst [vmem:[%s259] sm:$0xff] %v1146
        %1163 = vst [vmem:[%s259 + $0x8] sm:$0xff] %v1147
        %1164 = vst [vmem:[%s259 + $0x10] sm:$0xff] %v1148
        %1165 = vst [vmem:[%s259 + $0x18] sm:$0xff] %v1149
        %1166 = vst [vmem:[%s259 + $0x20] sm:$0xff] %v1150
        %1167 = vst [vmem:[%s259 + $0x28] sm:$0xff] %v1151
        %1168 = vst [vmem:[%s259 + $0x30] sm:$0xff] %v1152
        %1169 = vst [vmem:[%s259 + $0x38] sm:$0xff] %v1153
        %1170 = vst [vmem:[%s259 + $0x40] sm:$0xff] %v1154
        %1171 = vst [vmem:[%s259 + $0x48] sm:$0xff] %v1155
        %1172 = vst [vmem:[%s259 + $0x50] sm:$0xff] %v1156
        %1173 = vst [vmem:[%s259 + $0x58] sm:$0xff] %v1157
        %1174 = vst [vmem:[%s259 + $0x60] sm:$0xff] %v1158
        %1175 = vst [vmem:[%s259 + $0x68] sm:$0xff] %v1159
        %1176 = vst [vmem:[%s259 + $0x70] sm:$0xff] %v1160
        %1177 = vst [vmem:[%s259 + $0x78] sm:$0xff] %v1161
        %s1178 = sand.u32 %s156, 1
        %s1179 = scalar_lea.sflag [#allocation4], %s1178
        %s1180 = sand.u32 %s156, 1
        %s1181 = smul.addr %s1180, 128
        %s1182 = scalar_lea.vmem [#allocation5], %s1181
        // Predicated region
        $region45: #{tpu_custom_call.1} parent=39 // pred_check
          %p1183 = pneg %p166
        $region46: #{tpu_custom_call.1} parent=39 // pred_check_branch
          %1185 = sbr.rel (%p1183) target = $region48
        $region47: #{tpu_custom_call.1} parent=39 // pred_region
          %s1187 = ssub.s32 2048, 2048
          %1188 = vsyncadd %s1179, %s1187
          %s1189 = smul.addr %s26, 32
          %s1190 = sadd.s32 %s27, %s1189
          %s1191 = smul.addr %s1190, 128
          %s1192 = scalar_lea.hbm %s5, %s1191
          %s1193 = sshll.u32 %s1182, 4
          %s1194 = int_to_ptr.vmem [resolvable:$true] %s1193
          %1199 = dma.vmem_to_hbm [thread:$0]  %s1194, 2048, %s1192, %s1179, 128, 256, 8
        $region48: #{tpu_custom_call.1} parent=39 // pred_fallthru
          _
      $region40: #{tpu_custom_call.1} parent=5 // pred_fallthru
        _
      %p1200 = scmp.le.s32.totalorder 2, %s17
      // Predicated region
      $region49: #{tpu_custom_call.1} parent=5 // pred_check
        %p1201 = pneg %p1200
      $region50: #{tpu_custom_call.1} parent=5 // pred_check_branch
        %1203 = sbr.rel (%p1201) target = $region52
      $region51: #{tpu_custom_call.1} parent=5 // pred_region
        %s1204 = ssub.s32 %s17, 2
        // Predicated region
        $region53: #{tpu_custom_call.1} parent=51 // pred_check
          %p1205 = pneg %p172
        $region54: #{tpu_custom_call.1} parent=51 // pred_check_branch
          %1207 = sbr.rel (%p1205) target = $region56
        $region55: #{tpu_custom_call.1} parent=51 // pred_region
          %s1208 = sand.u32 %s157, 1
          %s1209 = scalar_lea.sflag [#allocation4], %s1208
          %s1210 = sand.u32 %s157, 1
          %s1211 = smul.addr %s1210, 128
          %s1212 = scalar_lea.vmem [#allocation5], %s1211
          %1213 = dma.done %s1209, 2048
        $region56: #{tpu_custom_call.1} parent=51 // pred_fallthru
          _
      $region52: #{tpu_custom_call.1} parent=5 // pred_fallthru
        _
    $region6: #{tpu_custom_call.1} parent=1 // loop_footer
      %s21 = sadd.s32 1, %s17
    $region7: #{tpu_custom_call.1} parent=1 // loop_footer_branch
      %16 = sbr.rel target = $region3
    $region8: #{tpu_custom_call.1} parent=1 // loop_exit
      _
    %1214 = vsyncpa [#allocation3], 1
    %s1215 = scalar_lea.sflag [#allocation3], 1
    %1216 = vsyncpa %s1215, 1
    %1217 = vsyncpa [#allocation4], 1
    %s1218 = scalar_lea.sflag [#allocation4], 1
    %1219 = vsyncpa %s1218, 1

// kernel: tpu_custom_call.1
$region0: #{tpu_custom_call.1}
  #allocation0 [shape = 'u32[]', space=smem, size = 0x4, offset = 0x4, fixed_abs, tag = 'smem constant byte address 0x4 - core index']
  #allocation1 [shape = 'u32[144,128]{1,0:T(1,128)}', space=vmem, size = 0x12000, scoped, tag = 'internal scratch']
  %s0 = inlined_call_operand.hbm [shape: bf16[2,18,16,48], index: 0, kind: input, shape index: {}]
  %s1 = inlined_call_operand.vmem [shape: bf16[3,48,32], index: 1, kind: input, shape index: {}]
  %s2 = inlined_call_operand.vmem [shape: f32[1,32], index: 2, kind: input, shape index: {}]
  %s3 = inlined_call_operand.vmem [shape: bf16[32,128], index: 3, kind: input, shape index: {}]
  %s4 = inlined_call_operand.vmem [shape: f32[1,128], index: 4, kind: input, shape index: {}]
  %s5 = inlined_call_operand.hbm [shape: f32[2,16,16,128], index: 5, kind: output, shape index: {}]
  %s6 = sld [smem:[#allocation0]]
  $region57: #{tpu_custom_call.1} parent=0
    _
  %s8 = ssub.s32 1, %s6
  %s9 = scalar_select 0, %s8, %s6
  $region1: #{tpu_custom_call.1} parent=0
    #allocation2 [shape = 'u8[73728]{0}', space=vmem, size = 0x12000, scoped, tag = 'input window, operand 0']
    #allocation3 [shape = 's32[2]{0}', space=sflag, size = 0x8, scoped, tag = 'scoped memory for tpu_custom_call.1']
    #allocation4 [shape = 's32[2]{0}', space=sflag, size = 0x8, scoped, tag = 'scoped memory for tpu_custom_call.1']
    #allocation5 [shape = 'u8[131072]{0}', space=vmem, size = 0x20000, scoped, tag = 'output window, operand 0']
    %10 = vsyncpa [#allocation3], 0
    %s11 = scalar_lea.sflag [#allocation3], 1
    %12 = vsyncpa %s11, 0
    %13 = vsyncpa [#allocation4], 0
    %s14 = scalar_lea.sflag [#allocation4], 1
    %15 = vsyncpa %s14, 0
    loop: start=0, step=1, limit=6
    $region2: #{tpu_custom_call.1} parent=1 // loop_pre_header
      _
    $region3: #{tpu_custom_call.1} parent=1 // loop_header
      %s17 = sphi 0, %s21
      %p18 = scmp.ge.s32.totalorder %s17, 6
      %s24 = sphi 0, %s36
      %s25 = sphi 0, %s32
      %s26 = sphi 0, %s24
      %s27 = sphi 0, %s25
      %s28 = sphi 0, %s26
      %s29 = sphi 0, %s27
      %s41 = sphi 0, %s43
      %s44 = sphi 0, %s41
      %s45 = sphi 0, %s44
      %s61 = sphi 0, %s45
      %s65 = sphi 0, %s65
      %s67 = sphi 0, %s65
      %s68 = sphi 0, %s67
      %s82 = sphi 0, %s68
      %s86 = sphi 0, %s86
      %s88 = sphi 0, %s86
      %s89 = sphi 0, %s88
      %s103 = sphi 0, %s89
      %s107 = sphi 0, %s107
      %s109 = sphi 0, %s107
      %s110 = sphi 0, %s109
      %s124 = sphi 0, %s110
      %s128 = sphi 0, %s128
      %s130 = sphi 0, %s128
      %s131 = sphi 0, %s130
      %s145 = sphi 0, %s131
      %s153 = sphi 0, %s155
      %s156 = sphi 0, %s153
      %s157 = sphi 0, %s156
      %s173 = sphi 0, %s157
    $region4: #{tpu_custom_call.1} parent=1 // loop_header_branch
      %20 = sbr.rel (%p18) target = $region8
    $region5: #{tpu_custom_call.1} parent=1 // loop_body
      %s22 = ssub.s32 %s17, 1
      %s23 = ssub.s32 %s17, 2
      %s30 = sadd.s32 1, %s25
      %p31 = scmp.ge.s32.totalorder %s30, 2
      %s32 = scalar_select %p31, 0, %s30
      %s33 = sadd.s32 1, %s24
      %s34 = scalar_select %p31, %s33, %s24
      %p35 = scmp.ge.s32.totalorder %s34, 2
      %s36 = scalar_select %p35, 0, %s34
      %s37 = ssub.s32 %s24, %s36
      %s38 = ssub.s32 %s25, %s32
      %s39 = sor.u32 %s37, %s38
      %p40 = scmp.eq.s32.totalorder %s39, 0
      %s42 = sadd.s32 %s41, 1
      %s43 = scalar_select %p40, %s41, %s42
      %p46 = pneg %p40
      %p47 = scmp.eq.s32.totalorder %s17, 3
      %p48 = por %p46, %p47
      %p49 = scmp.ne.s32.totalorder %s41, %s44
      %p50 = scmp.eq.s32.totalorder %s17, 0
      %p51 = por %p49, %p50
      %p52 = scmp.ne.s32.totalorder %s41, %s44
      %p53 = scmp.eq.s32.totalorder %s22, 3
      %p54 = por %p52, %p53
      %p55 = scmp.ne.s32.totalorder %s44, %s45
      %p56 = scmp.eq.s32.totalorder %s22, 0
      %p57 = por %p55, %p56
      %p58 = scmp.ne.s32.totalorder %s44, %s45
      %p59 = scmp.eq.s32.totalorder %s23, 3
      %p60 = por %p58, %p59
      %p62 = scmp.ne.s32.totalorder %s45, %s61
      %p63 = scmp.eq.s32.totalorder %s23, 0
      %p64 = por %p62, %p63
      %s66 = sadd.s32 %s65, 1
      %p69 = scmp.eq.s32.totalorder %s17, 3
      %p70 = scmp.ne.s32.totalorder %s65, %s67
      %p71 = scmp.eq.s32.totalorder %s17, 0
      %p72 = por %p70, %p71
      %p73 = scmp.ne.s32.totalorder %s65, %s67
      %p74 = scmp.eq.s32.totalorder %s22, 3
      %p75 = por %p73, %p74
      %p76 = scmp.ne.s32.totalorder %s67, %s68
      %p77 = scmp.eq.s32.totalorder %s22, 0
      %p78 = por %p76, %p77
      %p79 = scmp.ne.s32.totalorder %s67, %s68
      %p80 = scmp.eq.s32.totalorder %s23, 3
      %p81 = por %p79, %p80
      %p83 = scmp.ne.s32.totalorder %s68, %s82
      %p84 = scmp.eq.s32.totalorder %s23, 0
      %p85 = por %p83, %p84
      %s87 = sadd.s32 %s86, 1
      %p90 = scmp.eq.s32.totalorder %s17, 3
      %p91 = scmp.ne.s32.totalorder %s86, %s88
      %p92 = scmp.eq.s32.totalorder %s17, 0
      %p93 = por %p91, %p92
      %p94 = scmp.ne.s32.totalorder %s86, %s88
      %p95 = scmp.eq.s32.totalorder %s22, 3
      %p96 = por %p94, %p95
      %p97 = scmp.ne.s32.totalorder %s88, %s89
      %p98 = scmp.eq.s32.totalorder %s22, 0
      %p99 = por %p97, %p98
      %p100 = scmp.ne.s32.totalorder %s88, %s89
      %p101 = scmp.eq.s32.totalorder %s23, 3
      %p102 = por %p100, %p101
      %p104 = scmp.ne.s32.totalorder %s89, %s103
      %p105 = scmp.eq.s32.totalorder %s23, 0
      %p106 = por %p104, %p105
      %s108 = sadd.s32 %s107, 1
      %p111 = scmp.eq.s32.totalorder %s17, 3
      %p112 = scmp.ne.s32.totalorder %s107, %s109
      %p113 = scmp.eq.s32.totalorder %s17, 0
      %p114 = por %p112, %p113
      %p115 = scmp.ne.s32.totalorder %s107, %s109
      %p116 = scmp.eq.s32.totalorder %s22, 3
      %p117 = por %p115, %p116
      %p118 = scmp.ne.s32.totalorder %s109, %s110
      %p119 = scmp.eq.s32.totalorder %s22, 0
      %p120 = por %p118, %p119
      %p121 = scmp.ne.s32.totalorder %s109, %s110
      %p122 = scmp.eq.s32.totalorder %s23, 3
      %p123 = por %p121, %p122
      %p125 = scmp.ne.s32.totalorder %s110, %s124
      %p126 = scmp.eq.s32.totalorder %s23, 0
      %p127 = por %p125, %p126
      %s129 = sadd.s32 %s128, 1
      %p132 = scmp.eq.s32.totalorder %s17, 3
      %p133 = scmp.ne.s32.totalorder %s128, %s130
      %p134 = scmp.eq.s32.totalorder %s17, 0
      %p135 = por %p133, %p134
      %p136 = scmp.ne.s32.totalorder %s128, %s130
      %p137 = scmp.eq.s32.totalorder %s22, 3
      %p138 = por %p136, %p137
      %p139 = scmp.ne.s32.totalorder %s130, %s131
      %p140 = scmp.eq.s32.totalorder %s22, 0
      %p141 = por %p139, %p140
      %p142 = scmp.ne.s32.totalorder %s130, %s131
      %p143 = scmp.eq.s32.totalorder %s23, 3
      %p144 = por %p142, %p143
      %p146 = scmp.ne.s32.totalorder %s131, %s145
      %p147 = scmp.eq.s32.totalorder %s23, 0
      %p148 = por %p146, %p147
      %s149 = ssub.s32 %s24, %s36
      %s150 = ssub.s32 %s25, %s32
      %s151 = sor.u32 %s149, %s150
      %p152 = scmp.eq.s32.totalorder %s151, 0
      %s154 = sadd.s32 %s153, 1
      %s155 = scalar_select %p152, %s153, %s154
      %p158 = pneg %p152
      %p159 = scmp.eq.s32.totalorder %s17, 3
      %p160 = por %p158, %p159
      %p161 = scmp.ne.s32.totalorder %s153, %s156
      %p162 = scmp.eq.s32.totalorder %s17, 0
      %p163 = por %p161, %p162
      %p164 = scmp.ne.s32.totalorder %s153, %s156
      %p165 = scmp.eq.s32.totalorder %s22, 3
      %p166 = por %p164, %p165
      %p167 = scmp.ne.s32.totalorder %s156, %s157
      %p168 = scmp.eq.s32.totalorder %s22, 0
      %p169 = por %p167, %p168
      %p170 = scmp.ne.s32.totalorder %s156, %s157
      %p171 = scmp.eq.s32.totalorder %s23, 3
      %p172 = por %p170, %p171
      %p174 = scmp.ne.s32.totalorder %s157, %s173
      %p175 = scmp.eq.s32.totalorder %s23, 0
      %p176 = por %p174, %p175
      %p177 = scmp.le.s32.totalorder 1, %s17
      %p178 = scmp.lt.s32.totalorder %s17, 5
      %p179 = pnand %p177, %p178
      %p180 = pneg %p179
      // Predicated region
      $region9: #{tpu_custom_call.1} parent=5 // pred_check
        _
      $region10: #{tpu_custom_call.1} parent=5 // pred_check_branch
        %182 = sbr.rel (%p179) target = $region12
      $region11: #{tpu_custom_call.1} parent=5 // pred_region
        %s183 = ssub.s32 %s17, 1
        // Predicated region
        $region13: #{tpu_custom_call.1} parent=11 // pred_check
          %p184 = pneg %p78
        $region14: #{tpu_custom_call.1} parent=11 // pred_check_branch
          %186 = sbr.rel (%p184) target = $region16
        $region15: #{tpu_custom_call.1} parent=11 // pred_region
          _
        $region16: #{tpu_custom_call.1} parent=11 // pred_fallthru
          _
        // Predicated region
        $region17: #{tpu_custom_call.1} parent=11 // pred_check
          %p187 = pneg %p99
        $region18: #{tpu_custom_call.1} parent=11 // pred_check_branch
          %189 = sbr.rel (%p187) target = $region20
        $region19: #{tpu_custom_call.1} parent=11 // pred_region
          _
        $region20: #{tpu_custom_call.1} parent=11 // pred_fallthru
          _
        // Predicated region
        $region21: #{tpu_custom_call.1} parent=11 // pred_check
          %p190 = pneg %p120
        $region22: #{tpu_custom_call.1} parent=11 // pred_check_branch
          %192 = sbr.rel (%p190) target = $region24
        $region23: #{tpu_custom_call.1} parent=11 // pred_region
          _
        $region24: #{tpu_custom_call.1} parent=11 // pred_fallthru
          _
        // Predicated region
        $region25: #{tpu_custom_call.1} parent=11 // pred_check
          %p193 = pneg %p141
        $region26: #{tpu_custom_call.1} parent=11 // pred_check_branch
          %195 = sbr.rel (%p193) target = $region28
        $region27: #{tpu_custom_call.1} parent=11 // pred_region
          _
        $region28: #{tpu_custom_call.1} parent=11 // pred_fallthru
          _
      $region12: #{tpu_custom_call.1} parent=5 // pred_fallthru
        _
      %p196 = scmp.lt.s32.totalorder %s17, 4
      // Predicated region
      $region29: #{tpu_custom_call.1} parent=5 // pred_check
        %p197 = pneg %p196
      $region30: #{tpu_custom_call.1} parent=5 // pred_check_branch
        %199 = sbr.rel (%p197) target = $region32
      $region31: #{tpu_custom_call.1} parent=5 // pred_region
        // Predicated region
        $region33: #{tpu_custom_call.1} parent=31 // pred_check
          %p200 = pneg %p51
        $region34: #{tpu_custom_call.1} parent=31 // pred_check_branch
          %202 = sbr.rel (%p200) target = $region36
        $region35: #{tpu_custom_call.1} parent=31 // pred_region
          %s203 = sand.u32 %s41, 1
          %s204 = scalar_lea.sflag [#allocation3], %s203
          %s205 = sand.u32 %s41, 1
          %s206 = smul.addr %s205, 72
          %s207 = scalar_lea.vmem [#allocation2], %s206
          %s209 = ssub.s32 1152, 1152
          %210 = vsyncadd %s204, %s209
          %s211 = smul.addr %s24, 36
          %s212 = sadd.s32 %s25, %s211
          %s213 = smul.addr %s212, 64
          %s214 = scalar_lea.hbm %s0, %s213
          %s215 = sshll.u32 %s207, 4
          %s216 = int_to_ptr.vmem [resolvable:$true] %s215
          %221 = dma.hbm_to_vmem [thread:$0]  %s214, 1152, %s216, %s204, 128, 64, 4
        $region36: #{tpu_custom_call.1} parent=31 // pred_fallthru
          _
      $region32: #{tpu_custom_call.1} parent=5 // pred_fallthru
        _
      %p222 = scmp.le.s32.totalorder 1, %s17
      %p223 = scmp.lt.s32.totalorder %s17, 5
      %p224 = pnand %p222, %p223
      %p225 = pneg %p224
      // Predicated region
      $region37: #{tpu_custom_call.1} parent=5 // pred_check
        _
      $region38: #{tpu_custom_call.1} parent=5 // pred_check_branch
        %227 = sbr.rel (%p224) target = $region40
      $region39: #{tpu_custom_call.1} parent=5 // pred_region
        %s228 = ssub.s32 %s17, 1
        %s229 = sand.u32 %s44, 1
        %s230 = scalar_lea.sflag [#allocation3], %s229
        %s231 = sand.u32 %s44, 1
        %s232 = smul.addr %s231, 72
        %s233 = scalar_lea.vmem [#allocation2], %s232
        // Predicated region
        $region41: #{tpu_custom_call.1} parent=39 // pred_check
          %p234 = pneg %p57
        $region42: #{tpu_custom_call.1} parent=39 // pred_check_branch
          %236 = sbr.rel (%p234) target = $region44
        $region43: #{tpu_custom_call.1} parent=39 // pred_region
          %237 = dma.done %s230, 1152
        $region44: #{tpu_custom_call.1} parent=39 // pred_fallthru
          _
        %s238 = sand.u32 %s44, 1
        %s239 = scalar_lea.sflag [#allocation3], %s238
        %s240 = sand.u32 %s44, 1
        %s241 = smul.addr %s240, 72
        %s242 = scalar_lea.vmem [#allocation2], %s241
        %p243 = pneg %p57
        %p244 = pneg %p54
        %p245 = pneg %p78
        %p246 = pneg %p75
        %p247 = pneg %p99
        %p248 = pneg %p96
        %p249 = pneg %p120
        %p250 = pneg %p117
        %p251 = pneg %p141
        %p252 = pneg %p138
        %p253 = pneg %p169
        %p254 = pneg %p166
        %s255 = sand.u32 %s156, 1
        %s256 = scalar_lea.sflag [#allocation4], %s255
        %s257 = sand.u32 %s156, 1
        %s258 = smul.addr %s257, 128
        %s259 = scalar_lea.vmem [#allocation5], %s258
        %v261 = vld [vmem:[%s233] sm:$0xf]
        %v262 = vld [vmem:[%s233 + $0x4] sm:$0xf]
        %v263 = vld [vmem:[%s233 + $0x8] sm:$0xf]
        %v264 = vld [vmem:[%s233 + $0xc] sm:$0xf]
        %v265 = vld [vmem:[%s233 + $0x10] sm:$0xf]
        %v266 = vld [vmem:[%s233 + $0x14] sm:$0xf]
        %v267 = vld [vmem:[%s233 + $0x18] sm:$0xf]
        %v268 = vld [vmem:[%s233 + $0x1c] sm:$0xf]
        %v269 = vld [vmem:[%s233 + $0x20] sm:$0xf]
        %v270 = vld [vmem:[%s233 + $0x24] sm:$0xf]
        %v271 = vld [vmem:[%s233 + $0x28] sm:$0xf]
        %v272 = vld [vmem:[%s233 + $0x2c] sm:$0xf]
        %v273 = vld [vmem:[%s233 + $0x30] sm:$0xf]
        %v274 = vld [vmem:[%s233 + $0x34] sm:$0xf]
        %v275 = vld [vmem:[%s233 + $0x38] sm:$0xf]
        %v276 = vld [vmem:[%s233 + $0x3c] sm:$0xf]
        %v277 = vld [vmem:[%s1] sm:$0xf]
        %v278 = vld [vmem:[%s1 + $0x4] sm:$0xf]
        %v279 = vld [vmem:[%s1 + $0x8] sm:$0xf]
        %v280 = vld [vmem:[%s1 + $0xc] sm:$0xf]
        %v281 = vld [vmem:[%s1 + $0x10] sm:$0xf]
        %v282 = vld [vmem:[%s1 + $0x14] sm:$0xf]
        %s283 = scalar_lea.vmem %s233, 4 [#allocation2]
        %v284 = vld [vmem:[%s283] sm:$0xf]
        %v285 = vld [vmem:[%s283 + $0x4] sm:$0xf]
        %v286 = vld [vmem:[%s283 + $0x8] sm:$0xf]
        %v287 = vld [vmem:[%s283 + $0xc] sm:$0xf]
        %v288 = vld [vmem:[%s283 + $0x10] sm:$0xf]
        %v289 = vld [vmem:[%s283 + $0x14] sm:$0xf]
        %v290 = vld [vmem:[%s283 + $0x18] sm:$0xf]
        %v291 = vld [vmem:[%s283 + $0x1c] sm:$0xf]
        %v292 = vld [vmem:[%s283 + $0x20] sm:$0xf]
        %v293 = vld [vmem:[%s283 + $0x24] sm:$0xf]
        %v294 = vld [vmem:[%s283 + $0x28] sm:$0xf]
        %v295 = vld [vmem:[%s283 + $0x2c] sm:$0xf]
        %v296 = vld [vmem:[%s283 + $0x30] sm:$0xf]
        %v297 = vld [vmem:[%s283 + $0x34] sm:$0xf]
        %v298 = vld [vmem:[%s283 + $0x38] sm:$0xf]
        %v299 = vld [vmem:[%s283 + $0x3c] sm:$0xf]
        %s300 = scalar_lea.vmem %s1, 24
        %v301 = vld [vmem:[%s300] sm:$0xf]
        %v302 = vld [vmem:[%s300 + $0x4] sm:$0xf]
        %v303 = vld [vmem:[%s300 + $0x8] sm:$0xf]
        %v304 = vld [vmem:[%s300 + $0xc] sm:$0xf]
        %v305 = vld [vmem:[%s300 + $0x10] sm:$0xf]
        %v306 = vld [vmem:[%s300 + $0x14] sm:$0xf]
        %v323 = vunpack.c.l.b16 %v284
        %v324 = vunpack.c.l.b16 %v285
        %v325 = vunpack.c.l.b16 %v286
        %v326 = vunpack.c.l.b16 %v287
        %v327 = vunpack.c.l.b16 %v288
        %v328 = vunpack.c.l.b16 %v289
        %v329 = vunpack.c.l.b16 %v290
        %v330 = vunpack.c.l.b16 %v291
        %v331 = vunpack.c.l.b16 %v292
        %v332 = vunpack.c.l.b16 %v293
        %v333 = vunpack.c.l.b16 %v294
        %v334 = vunpack.c.l.b16 %v295
        %v335 = vunpack.c.l.b16 %v296
        %v336 = vunpack.c.l.b16 %v297
        %v337 = vunpack.c.l.b16 %v298
        %v338 = vunpack.c.l.b16 %v299
        %v339 = vpack.c.b16 %v324, %v323
        %v340 = vpack.c.b16 %v326, %v325
        %v341 = vpack.c.b16 %v328, %v327
        %v342 = vpack.c.b16 %v330, %v329
        %v343 = vpack.c.b16 %v332, %v331
        %v344 = vpack.c.b16 %v334, %v333
        %v345 = vpack.c.b16 %v336, %v335
        %v346 = vpack.c.b16 %v338, %v337
        %v353 = vunpack.c.l.b16 %v301
        %v354 = vunpack.c.l.b16 %v302
        %v355 = vunpack.c.l.b16 %v303
        %v356 = vunpack.c.l.b16 %v304
        %v357 = vunpack.c.l.b16 %v305
        %v358 = vunpack.c.l.b16 %v306
        %v359 = vpack.c.b16 %v354, %v353
        %v360 = vpack.c.b16 %v356, %v355
        %v361 = vpack.c.b16 %v358, %v357
        %vm365 = vcmask 392192
        %v367 = vsel %vm365, %v339, 0
        %v370 = vsel %vm365, %v340, 0
        %v373 = vsel %vm365, %v341, 0
        %v376 = vsel %vm365, %v342, 0
        %v379 = vsel %vm365, %v343, 0
        %v382 = vsel %vm365, %v344, 0
        %v385 = vsel %vm365, %v345, 0
        %v388 = vsel %vm365, %v346, 0
        %390 = vmatprep.subr.bf16.mxu0 0
        %391 = vmatpush1.bf16.msra.mxu0 0
        %392 = vmatprep.subr.bf16.mxu0 0
        %393 = vmatpush1.bf16.msra.mxu0 0
        %394 = vmatprep.subr.bf16.mxu0 0
        %395 = vmatpush1.bf16.msra.mxu0 0
        %396 = vmatprep.subr.bf16.mxu0 0
        %397 = vmatpush1.bf16.msra.mxu0 0
        %398 = vmatprep.subr.bf16.mxu0 0
        %399 = vmatpush1.bf16.msra.mxu0 0
        %400 = vmatprep.subr.bf16.mxu0 0
        %401 = vmatpush1.bf16.msra.mxu0 %v361
        %402 = vmatprep.subr.bf16.mxu0 0
        %403 = vmatpush1.bf16.msra.mxu0 %v360
        %404 = vmatprep.subr.bf16.mxu0 0
        %405 = vmatpush1.bf16.msra.mxu0 %v359
        %406 = vmatprep.subr.bf16.mxu0 0
        %407 = vmatpush2.bf16.msra.mxu0 0
        %408 = vmatprep.subr.bf16.mxu0 0
        %409 = vmatpush2.bf16.msra.mxu0 0
        %410 = vmatprep.subr.bf16.mxu0 0
        %411 = vmatpush2.bf16.msra.mxu0 0
        %412 = vmatprep.subr.bf16.mxu0 0
        %413 = vmatpush2.bf16.msra.mxu0 0
        %414 = vmatprep.subr.bf16.mxu0 0
        %415 = vmatpush2.bf16.msra.mxu0 0
        %416 = vmatprep.subr.bf16.mxu0 0
        %417 = vmatpush2.bf16.msra.mxu0 0
        %418 = vmatprep.subr.bf16.mxu0 0
        %419 = vmatpush2.bf16.msra.mxu0 0
        %420 = vmatprep.subr.bf16.mxu0 0
        %421 = vmatpush2.bf16.msra.mxu0 0
        %422 = vmatprep.mubr.bf16.mxu0 0
        %423 = vmatmul.mubr.bf16.gmra.mxu0 %v367
        %v424 = vpop.f32.mrf.mxu0
        %v425 = vadd.f32 0.0, %v424
        %v426 = vpop.f32.mrf.mxu0
        %v427 = vpop.f32.mrf.mxu0
        %v428 = vadd.f32 0.0, %v427
        %v429 = vpop.f32.mrf.mxu0
        %430 = vmatprep.mubr.bf16.mxu0 0
        %431 = vmatmul.mubr.bf16.gmra.mxu0 %v370
        %v432 = vpop.f32.mrf.mxu0
        %v433 = vadd.f32 0.0, %v432
        %v434 = vpop.f32.mrf.mxu0
        %v435 = vpop.f32.mrf.mxu0
        %v436 = vadd.f32 0.0, %v435
        %v437 = vpop.f32.mrf.mxu0
        %438 = vmatprep.mubr.bf16.mxu0 0
        %439 = vmatmul.mubr.bf16.gmra.mxu0 %v373
        %v440 = vpop.f32.mrf.mxu0
        %v441 = vadd.f32 0.0, %v440
        %v442 = vpop.f32.mrf.mxu0
        %v443 = vpop.f32.mrf.mxu0
        %v444 = vadd.f32 0.0, %v443
        %v445 = vpop.f32.mrf.mxu0
        %446 = vmatprep.mubr.bf16.mxu0 0
        %447 = vmatmul.mubr.bf16.gmra.mxu0 %v376
        %v448 = vpop.f32.mrf.mxu0
        %v449 = vadd.f32 0.0, %v448
        %v450 = vpop.f32.mrf.mxu0
        %v451 = vpop.f32.mrf.mxu0
        %v452 = vadd.f32 0.0, %v451
        %v453 = vpop.f32.mrf.mxu0
        %454 = vmatprep.mubr.bf16.mxu0 0
        %455 = vmatmul.mubr.bf16.gmra.mxu0 %v379
        %v456 = vpop.f32.mrf.mxu0
        %v457 = vadd.f32 0.0, %v456
        %v458 = vpop.f32.mrf.mxu0
        %v459 = vpop.f32.mrf.mxu0
        %v460 = vadd.f32 0.0, %v459
        %v461 = vpop.f32.mrf.mxu0
        %462 = vmatprep.mubr.bf16.mxu0 0
        %463 = vmatmul.mubr.bf16.gmra.mxu0 %v382
        %v464 = vpop.f32.mrf.mxu0
        %v465 = vadd.f32 0.0, %v464
        %v466 = vpop.f32.mrf.mxu0
        %v467 = vpop.f32.mrf.mxu0
        %v468 = vadd.f32 0.0, %v467
        %v469 = vpop.f32.mrf.mxu0
        %470 = vmatprep.mubr.bf16.mxu0 0
        %471 = vmatmul.mubr.bf16.gmra.mxu0 %v385
        %v472 = vpop.f32.mrf.mxu0
        %v473 = vadd.f32 0.0, %v472
        %v474 = vpop.f32.mrf.mxu0
        %v475 = vpop.f32.mrf.mxu0
        %v476 = vadd.f32 0.0, %v475
        %v477 = vpop.f32.mrf.mxu0
        %478 = vmatprep.mubr.bf16.mxu0 0
        %479 = vmatmul.mubr.bf16.gmra.mxu0 %v388
        %v480 = vpop.f32.mrf.mxu0
        %v481 = vadd.f32 0.0, %v480
        %v482 = vpop.f32.mrf.mxu0
        %v483 = vpop.f32.mrf.mxu0
        %v484 = vadd.f32 0.0, %v483
        %v485 = vpop.f32.mrf.mxu0
        %486 = vdwg.mxu0
        %v503 = vunpack.c.l.b16 %v261
        %v504 = vunpack.c.l.b16 %v262
        %v505 = vunpack.c.l.b16 %v263
        %v506 = vunpack.c.l.b16 %v264
        %v507 = vunpack.c.l.b16 %v265
        %v508 = vunpack.c.l.b16 %v266
        %v509 = vunpack.c.l.b16 %v267
        %v510 = vunpack.c.l.b16 %v268
        %v511 = vunpack.c.l.b16 %v269
        %v512 = vunpack.c.l.b16 %v270
        %v513 = vunpack.c.l.b16 %v271
        %v514 = vunpack.c.l.b16 %v272
        %v515 = vunpack.c.l.b16 %v273
        %v516 = vunpack.c.l.b16 %v274
        %v517 = vunpack.c.l.b16 %v275
        %v518 = vunpack.c.l.b16 %v276
        %v519 = vpack.c.b16 %v504, %v503
        %v520 = vpack.c.b16 %v506, %v505
        %v521 = vpack.c.b16 %v508, %v507
        %v522 = vpack.c.b16 %v510, %v509
        %v523 = vpack.c.b16 %v512, %v511
        %v524 = vpack.c.b16 %v514, %v513
        %v525 = vpack.c.b16 %v516, %v515
        %v526 = vpack.c.b16 %v518, %v517
        %v533 = vunpack.c.l.b16 %v277
        %v534 = vunpack.c.l.b16 %v278
        %v535 = vunpack.c.l.b16 %v279
        %v536 = vunpack.c.l.b16 %v280
        %v537 = vunpack.c.l.b16 %v281
        %v538 = vunpack.c.l.b16 %v282
        %v539 = vpack.c.b16 %v534, %v533
        %v540 = vpack.c.b16 %v536, %v535
        %v541 = vpack.c.b16 %v538, %v537
        %v546 = vsel %vm365, %v519, 0
        %v549 = vsel %vm365, %v520, 0
        %v552 = vsel %vm365, %v521, 0
        %v555 = vsel %vm365, %v522, 0
        %v558 = vsel %vm365, %v523, 0
        %v561 = vsel %vm365, %v524, 0
        %v564 = vsel %vm365, %v525, 0
        %v567 = vsel %vm365, %v526, 0
        %569 = vmatprep.subr.bf16.mxu0 0
        %570 = vmatpush1.bf16.msra.mxu0 0
        %571 = vmatprep.subr.bf16.mxu0 0
        %572 = vmatpush1.bf16.msra.mxu0 0
        %573 = vmatprep.subr.bf16.mxu0 0
        %574 = vmatpush1.bf16.msra.mxu0 0
        %575 = vmatprep.subr.bf16.mxu0 0
        %576 = vmatpush1.bf16.msra.mxu0 0
        %577 = vmatprep.subr.bf16.mxu0 0
        %578 = vmatpush1.bf16.msra.mxu0 0
        %579 = vmatprep.subr.bf16.mxu0 0
        %580 = vmatpush1.bf16.msra.mxu0 %v541
        %581 = vmatprep.subr.bf16.mxu0 0
        %582 = vmatpush1.bf16.msra.mxu0 %v540
        %583 = vmatprep.subr.bf16.mxu0 0
        %584 = vmatpush1.bf16.msra.mxu0 %v539
        %585 = vmatprep.subr.bf16.mxu0 0
        %586 = vmatpush2.bf16.msra.mxu0 0
        %587 = vmatprep.subr.bf16.mxu0 0
        %588 = vmatpush2.bf16.msra.mxu0 0
        %589 = vmatprep.subr.bf16.mxu0 0
        %590 = vmatpush2.bf16.msra.mxu0 0
        %591 = vmatprep.subr.bf16.mxu0 0
        %592 = vmatpush2.bf16.msra.mxu0 0
        %593 = vmatprep.subr.bf16.mxu0 0
        %594 = vmatpush2.bf16.msra.mxu0 0
        %595 = vmatprep.subr.bf16.mxu0 0
        %596 = vmatpush2.bf16.msra.mxu0 0
        %597 = vmatprep.subr.bf16.mxu0 0
        %598 = vmatpush2.bf16.msra.mxu0 0
        %599 = vmatprep.subr.bf16.mxu0 0
        %600 = vmatpush2.bf16.msra.mxu0 0
        %601 = vmatprep.mubr.bf16.mxu0 0
        %602 = vmatmul.mubr.bf16.gmra.mxu0 %v546
        %v603 = vpop.f32.mrf.mxu0
        %v604 = vadd.f32 %v425, %v603
        %v605 = vpop.f32.mrf.mxu0
        %v606 = vpop.f32.mrf.mxu0
        %v607 = vadd.f32 %v428, %v606
        %v608 = vpop.f32.mrf.mxu0
        %609 = vmatprep.mubr.bf16.mxu0 0
        %610 = vmatmul.mubr.bf16.gmra.mxu0 %v549
        %v611 = vpop.f32.mrf.mxu0
        %v612 = vadd.f32 %v433, %v611
        %v613 = vpop.f32.mrf.mxu0
        %v614 = vpop.f32.mrf.mxu0
        %v615 = vadd.f32 %v436, %v614
        %v616 = vpop.f32.mrf.mxu0
        %617 = vmatprep.mubr.bf16.mxu0 0
        %618 = vmatmul.mubr.bf16.gmra.mxu0 %v552
        %v619 = vpop.f32.mrf.mxu0
        %v620 = vadd.f32 %v441, %v619
        %v621 = vpop.f32.mrf.mxu0
        %v622 = vpop.f32.mrf.mxu0
        %v623 = vadd.f32 %v444, %v622
        %v624 = vpop.f32.mrf.mxu0
        %625 = vmatprep.mubr.bf16.mxu0 0
        %626 = vmatmul.mubr.bf16.gmra.mxu0 %v555
        %v627 = vpop.f32.mrf.mxu0
        %v628 = vadd.f32 %v449, %v627
        %v629 = vpop.f32.mrf.mxu0
        %v630 = vpop.f32.mrf.mxu0
        %v631 = vadd.f32 %v452, %v630
        %v632 = vpop.f32.mrf.mxu0
        %633 = vmatprep.mubr.bf16.mxu0 0
        %634 = vmatmul.mubr.bf16.gmra.mxu0 %v558
        %v635 = vpop.f32.mrf.mxu0
        %v636 = vadd.f32 %v457, %v635
        %v637 = vpop.f32.mrf.mxu0
        %v638 = vpop.f32.mrf.mxu0
        %v639 = vadd.f32 %v460, %v638
        %v640 = vpop.f32.mrf.mxu0
        %641 = vmatprep.mubr.bf16.mxu0 0
        %642 = vmatmul.mubr.bf16.gmra.mxu0 %v561
        %v643 = vpop.f32.mrf.mxu0
        %v644 = vadd.f32 %v465, %v643
        %v645 = vpop.f32.mrf.mxu0
        %v646 = vpop.f32.mrf.mxu0
        %v647 = vadd.f32 %v468, %v646
        %v648 = vpop.f32.mrf.mxu0
        %649 = vmatprep.mubr.bf16.mxu0 0
        %650 = vmatmul.mubr.bf16.gmra.mxu0 %v564
        %v651 = vpop.f32.mrf.mxu0
        %v652 = vadd.f32 %v473, %v651
        %v653 = vpop.f32.mrf.mxu0
        %v654 = vpop.f32.mrf.mxu0
        %v655 = vadd.f32 %v476, %v654
        %v656 = vpop.f32.mrf.mxu0
        %657 = vmatprep.mubr.bf16.mxu0 0
        %658 = vmatmul.mubr.bf16.gmra.mxu0 %v567
        %v659 = vpop.f32.mrf.mxu0
        %v660 = vadd.f32 %v481, %v659
        %v661 = vpop.f32.mrf.mxu0
        %v662 = vpop.f32.mrf.mxu0
        %v663 = vadd.f32 %v484, %v662
        %v664 = vpop.f32.mrf.mxu0
        %665 = vdwg.mxu0
        %s666 = scalar_lea.vmem %s233, 8 [#allocation2]
        %v667 = vld [vmem:[%s666] sm:$0xf]
        %v668 = vld [vmem:[%s666 + $0x4] sm:$0xf]
        %v669 = vld [vmem:[%s666 + $0x8] sm:$0xf]
        %v670 = vld [vmem:[%s666 + $0xc] sm:$0xf]
        %v671 = vld [vmem:[%s666 + $0x10] sm:$0xf]
        %v672 = vld [vmem:[%s666 + $0x14] sm:$0xf]
        %v673 = vld [vmem:[%s666 + $0x18] sm:$0xf]
        %v674 = vld [vmem:[%s666 + $0x1c] sm:$0xf]
        %v675 = vld [vmem:[%s666 + $0x20] sm:$0xf]
        %v676 = vld [vmem:[%s666 + $0x24] sm:$0xf]
        %v677 = vld [vmem:[%s666 + $0x28] sm:$0xf]
        %v678 = vld [vmem:[%s666 + $0x2c] sm:$0xf]
        %v679 = vld [vmem:[%s666 + $0x30] sm:$0xf]
        %v680 = vld [vmem:[%s666 + $0x34] sm:$0xf]
        %v681 = vld [vmem:[%s666 + $0x38] sm:$0xf]
        %v682 = vld [vmem:[%s666 + $0x3c] sm:$0xf]
        %s683 = scalar_lea.vmem %s1, 48
        %v684 = vld [vmem:[%s683] sm:$0xf]
        %v685 = vld [vmem:[%s683 + $0x4] sm:$0xf]
        %v686 = vld [vmem:[%s683 + $0x8] sm:$0xf]
        %v687 = vld [vmem:[%s683 + $0xc] sm:$0xf]
        %v688 = vld [vmem:[%s683 + $0x10] sm:$0xf]
        %v689 = vld [vmem:[%s683 + $0x14] sm:$0xf]
        %v706 = vunpack.c.l.b16 %v667
        %v707 = vunpack.c.l.b16 %v668
        %v708 = vunpack.c.l.b16 %v669
        %v709 = vunpack.c.l.b16 %v670
        %v710 = vunpack.c.l.b16 %v671
        %v711 = vunpack.c.l.b16 %v672
        %v712 = vunpack.c.l.b16 %v673
        %v713 = vunpack.c.l.b16 %v674
        %v714 = vunpack.c.l.b16 %v675
        %v715 = vunpack.c.l.b16 %v676
        %v716 = vunpack.c.l.b16 %v677
        %v717 = vunpack.c.l.b16 %v678
        %v718 = vunpack.c.l.b16 %v679
        %v719 = vunpack.c.l.b16 %v680
        %v720 = vunpack.c.l.b16 %v681
        %v721 = vunpack.c.l.b16 %v682
        %v722 = vpack.c.b16 %v707, %v706
        %v723 = vpack.c.b16 %v709, %v708
        %v724 = vpack.c.b16 %v711, %v710
        %v725 = vpack.c.b16 %v713, %v712
        %v726 = vpack.c.b16 %v715, %v714
        %v727 = vpack.c.b16 %v717, %v716
        %v728 = vpack.c.b16 %v719, %v718
        %v729 = vpack.c.b16 %v721, %v720
        %v736 = vunpack.c.l.b16 %v684
        %v737 = vunpack.c.l.b16 %v685
        %v738 = vunpack.c.l.b16 %v686
        %v739 = vunpack.c.l.b16 %v687
        %v740 = vunpack.c.l.b16 %v688
        %v741 = vunpack.c.l.b16 %v689
        %v742 = vpack.c.b16 %v737, %v736
        %v743 = vpack.c.b16 %v739, %v738
        %v744 = vpack.c.b16 %v741, %v740
        %v749 = vsel %vm365, %v722, 0
        %v752 = vsel %vm365, %v723, 0
        %v755 = vsel %vm365, %v724, 0
        %v758 = vsel %vm365, %v725, 0
        %v761 = vsel %vm365, %v726, 0
        %v764 = vsel %vm365, %v727, 0
        %v767 = vsel %vm365, %v728, 0
        %v770 = vsel %vm365, %v729, 0
        %772 = vmatprep.subr.bf16.mxu0 0
        %773 = vmatpush1.bf16.msra.mxu0 0
        %774 = vmatprep.subr.bf16.mxu0 0
        %775 = vmatpush1.bf16.msra.mxu0 0
        %776 = vmatprep.subr.bf16.mxu0 0
        %777 = vmatpush1.bf16.msra.mxu0 0
        %778 = vmatprep.subr.bf16.mxu0 0
        %779 = vmatpush1.bf16.msra.mxu0 0
        %780 = vmatprep.subr.bf16.mxu0 0
        %781 = vmatpush1.bf16.msra.mxu0 0
        %782 = vmatprep.subr.bf16.mxu0 0
        %783 = vmatpush1.bf16.msra.mxu0 %v744
        %784 = vmatprep.subr.bf16.mxu0 0
        %785 = vmatpush1.bf16.msra.mxu0 %v743
        %786 = vmatprep.subr.bf16.mxu0 0
        %787 = vmatpush1.bf16.msra.mxu0 %v742
        %788 = vmatprep.subr.bf16.mxu0 0
        %789 = vmatpush2.bf16.msra.mxu0 0
        %790 = vmatprep.subr.bf16.mxu0 0
        %791 = vmatpush2.bf16.msra.mxu0 0
        %792 = vmatprep.subr.bf16.mxu0 0
        %793 = vmatpush2.bf16.msra.mxu0 0
        %794 = vmatprep.subr.bf16.mxu0 0
        %795 = vmatpush2.bf16.msra.mxu0 0
        %796 = vmatprep.subr.bf16.mxu0 0
        %797 = vmatpush2.bf16.msra.mxu0 0
        %798 = vmatprep.subr.bf16.mxu0 0
        %799 = vmatpush2.bf16.msra.mxu0 0
        %800 = vmatprep.subr.bf16.mxu0 0
        %801 = vmatpush2.bf16.msra.mxu0 0
        %802 = vmatprep.subr.bf16.mxu0 0
        %803 = vmatpush2.bf16.msra.mxu0 0
        %804 = vmatprep.mubr.bf16.mxu0 0
        %805 = vmatmul.mubr.bf16.gmra.mxu0 %v749
        %v806 = vpop.f32.mrf.mxu0
        %v807 = vadd.f32 0.0, %v806
        %v808 = vpop.f32.mrf.mxu0
        %v809 = vpop.f32.mrf.mxu0
        %v810 = vadd.f32 0.0, %v809
        %v811 = vpop.f32.mrf.mxu0
        %812 = vmatprep.mubr.bf16.mxu0 0
        %813 = vmatmul.mubr.bf16.gmra.mxu0 %v752
        %v814 = vpop.f32.mrf.mxu0
        %v815 = vadd.f32 0.0, %v814
        %v816 = vpop.f32.mrf.mxu0
        %v817 = vpop.f32.mrf.mxu0
        %v818 = vadd.f32 0.0, %v817
        %v819 = vpop.f32.mrf.mxu0
        %820 = vmatprep.mubr.bf16.mxu0 0
        %821 = vmatmul.mubr.bf16.gmra.mxu0 %v755
        %v822 = vpop.f32.mrf.mxu0
        %v823 = vadd.f32 0.0, %v822
        %v824 = vpop.f32.mrf.mxu0
        %v825 = vpop.f32.mrf.mxu0
        %v826 = vadd.f32 0.0, %v825
        %v827 = vpop.f32.mrf.mxu0
        %828 = vmatprep.mubr.bf16.mxu0 0
        %829 = vmatmul.mubr.bf16.gmra.mxu0 %v758
        %v830 = vpop.f32.mrf.mxu0
        %v831 = vadd.f32 0.0, %v830
        %v832 = vpop.f32.mrf.mxu0
        %v833 = vpop.f32.mrf.mxu0
        %v834 = vadd.f32 0.0, %v833
        %v835 = vpop.f32.mrf.mxu0
        %836 = vmatprep.mubr.bf16.mxu0 0
        %837 = vmatmul.mubr.bf16.gmra.mxu0 %v761
        %v838 = vpop.f32.mrf.mxu0
        %v839 = vadd.f32 0.0, %v838
        %v840 = vpop.f32.mrf.mxu0
        %v841 = vpop.f32.mrf.mxu0
        %v842 = vadd.f32 0.0, %v841
        %v843 = vpop.f32.mrf.mxu0
        %844 = vmatprep.mubr.bf16.mxu0 0
        %845 = vmatmul.mubr.bf16.gmra.mxu0 %v764
        %v846 = vpop.f32.mrf.mxu0
        %v847 = vadd.f32 0.0, %v846
        %v848 = vpop.f32.mrf.mxu0
        %v849 = vpop.f32.mrf.mxu0
        %v850 = vadd.f32 0.0, %v849
        %v851 = vpop.f32.mrf.mxu0
        %852 = vmatprep.mubr.bf16.mxu0 0
        %853 = vmatmul.mubr.bf16.gmra.mxu0 %v767
        %v854 = vpop.f32.mrf.mxu0
        %v855 = vadd.f32 0.0, %v854
        %v856 = vpop.f32.mrf.mxu0
        %v857 = vpop.f32.mrf.mxu0
        %v858 = vadd.f32 0.0, %v857
        %v859 = vpop.f32.mrf.mxu0
        %860 = vmatprep.mubr.bf16.mxu0 0
        %861 = vmatmul.mubr.bf16.gmra.mxu0 %v770
        %v862 = vpop.f32.mrf.mxu0
        %v863 = vadd.f32 0.0, %v862
        %v864 = vpop.f32.mrf.mxu0
        %v865 = vpop.f32.mrf.mxu0
        %v866 = vadd.f32 0.0, %v865
        %v867 = vpop.f32.mrf.mxu0
        %868 = vdwg.mxu0
        %v869 = vadd.f32 %v604, %v807
        %v870 = vadd.f32 %v607, %v810
        %v871 = vadd.f32 %v612, %v815
        %v872 = vadd.f32 %v615, %v818
        %v873 = vadd.f32 %v620, %v823
        %v874 = vadd.f32 %v623, %v826
        %v875 = vadd.f32 %v628, %v831
        %v876 = vadd.f32 %v631, %v834
        %v877 = vadd.f32 %v636, %v839
        %v878 = vadd.f32 %v639, %v842
        %v879 = vadd.f32 %v644, %v847
        %v880 = vadd.f32 %v647, %v850
        %v881 = vadd.f32 %v652, %v855
        %v882 = vadd.f32 %v655, %v858
        %v883 = vadd.f32 %v660, %v863
        %v884 = vadd.f32 %v663, %v866
        %v885 = vld [vmem:[%s2] sm:$0x1]
        %v887 = vlaneseq
        %v888 = vshrl.u32 %v887, 7
        %v889 = vsub.s32 0, %v888
        %v890 = vrot.slane %v885, %v889
        %v892 = vadd.f32 %v869, %v890
        %v893 = vadd.f32 %v870, %v890
        %v894 = vadd.f32 %v871, %v890
        %v895 = vadd.f32 %v872, %v890
        %v896 = vadd.f32 %v873, %v890
        %v897 = vadd.f32 %v874, %v890
        %v898 = vadd.f32 %v875, %v890
        %v899 = vadd.f32 %v876, %v890
        %v900 = vadd.f32 %v877, %v890
        %v901 = vadd.f32 %v878, %v890
        %v902 = vadd.f32 %v879, %v890
        %v903 = vadd.f32 %v880, %v890
        %v904 = vadd.f32 %v881, %v890
        %v905 = vadd.f32 %v882, %v890
        %v906 = vadd.f32 %v883, %v890
        %v907 = vadd.f32 %v884, %v890
        %v908 = vmax.f32 %v892, 0.0
        %v909 = vmax.f32 %v893, 0.0
        %v910 = vmax.f32 %v894, 0.0
        %v911 = vmax.f32 %v895, 0.0
        %v912 = vmax.f32 %v896, 0.0
        %v913 = vmax.f32 %v897, 0.0
        %v914 = vmax.f32 %v898, 0.0
        %v915 = vmax.f32 %v899, 0.0
        %v916 = vmax.f32 %v900, 0.0
        %v917 = vmax.f32 %v901, 0.0
        %v918 = vmax.f32 %v902, 0.0
        %v919 = vmax.f32 %v903, 0.0
        %v920 = vmax.f32 %v904, 0.0
        %v921 = vmax.f32 %v905, 0.0
        %v922 = vmax.f32 %v906, 0.0
        %v923 = vmax.f32 %v907, 0.0
        %v924 = vpack.c.bf16 %v909, %v908
        %v925 = vpack.c.bf16 %v911, %v910
        %v926 = vpack.c.bf16 %v913, %v912
        %v927 = vpack.c.bf16 %v915, %v914
        %v928 = vpack.c.bf16 %v917, %v916
        %v929 = vpack.c.bf16 %v919, %v918
        %v930 = vpack.c.bf16 %v921, %v920
        %v931 = vpack.c.bf16 %v923, %v922
        %v932 = vld [vmem:[%s3] sm:$0xf]
        %v933 = vld [vmem:[%s3 + $0x4] sm:$0xf]
        %v934 = vld [vmem:[%s3 + $0x8] sm:$0xf]
        %v935 = vld [vmem:[%s3 + $0xc] sm:$0xf]
        %v936 = vld [vmem:[%s4] sm:$0x1]
        %v938 = vlaneseq
        %v939 = vshrl.u32 %v938, 7
        %v940 = vsub.s32 0, %v939
        %v941 = vrot.slane %v936, %v940
        %v947 = vunpack.c.l.b16 %v932
        %v948 = vunpack.c.l.b16 %v933
        %v949 = vunpack.c.l.b16 %v934
        %v950 = vunpack.c.l.b16 %v935
        %v951 = vpack.c.b16 %v948, %v947
        %v952 = vpack.c.b16 %v950, %v949
        %vm955 = vcmask 261120
        %v957 = vsel %vm955, %v924, 0
        %v960 = vsel %vm955, %v925, 0
        %v963 = vsel %vm955, %v926, 0
        %v966 = vsel %vm955, %v927, 0
        %v969 = vsel %vm955, %v928, 0
        %v972 = vsel %vm955, %v929, 0
        %v975 = vsel %vm955, %v930, 0
        %v978 = vsel %vm955, %v931, 0
        %980 = vmatprep.subr.bf16.mxu0 0
        %981 = vmatpush1.bf16.msra.mxu0 0
        %982 = vmatprep.subr.bf16.mxu0 0
        %983 = vmatpush1.bf16.msra.mxu0 0
        %984 = vmatprep.subr.bf16.mxu0 0
        %985 = vmatpush1.bf16.msra.mxu0 0
        %986 = vmatprep.subr.bf16.mxu0 0
        %987 = vmatpush1.bf16.msra.mxu0 0
        %988 = vmatprep.subr.bf16.mxu0 0
        %989 = vmatpush1.bf16.msra.mxu0 0
        %990 = vmatprep.subr.bf16.mxu0 0
        %991 = vmatpush1.bf16.msra.mxu0 0
        %992 = vmatprep.subr.bf16.mxu0 0
        %993 = vmatpush1.bf16.msra.mxu0 %v952
        %994 = vmatprep.subr.bf16.mxu0 0
        %995 = vmatpush1.bf16.msra.mxu0 %v951
        %996 = vmatprep.subr.bf16.mxu0 0
        %997 = vmatpush2.bf16.msra.mxu0 0
        %998 = vmatprep.subr.bf16.mxu0 0
        %999 = vmatpush2.bf16.msra.mxu0 0
        %1000 = vmatprep.subr.bf16.mxu0 0
        %1001 = vmatpush2.bf16.msra.mxu0 0
        %1002 = vmatprep.subr.bf16.mxu0 0
        %1003 = vmatpush2.bf16.msra.mxu0 0
        %1004 = vmatprep.subr.bf16.mxu0 0
        %1005 = vmatpush2.bf16.msra.mxu0 0
        %1006 = vmatprep.subr.bf16.mxu0 0
        %1007 = vmatpush2.bf16.msra.mxu0 0
        %1008 = vmatprep.subr.bf16.mxu0 0
        %1009 = vmatpush2.bf16.msra.mxu0 0
        %1010 = vmatprep.subr.bf16.mxu0 0
        %1011 = vmatpush2.bf16.msra.mxu0 0
        %1012 = vmatprep.mubr.bf16.mxu0 0
        %1013 = vmatmul.mubr.bf16.gmra.mxu0 %v957
        %v1014 = vpop.f32.mrf.mxu0
        %v1015 = vadd.f32 %v941, %v1014
        %v1016 = vpop.f32.mrf.mxu0
        %v1017 = vpop.f32.mrf.mxu0
        %v1018 = vadd.f32 %v941, %v1017
        %v1019 = vpop.f32.mrf.mxu0
        %1020 = vmatprep.mubr.bf16.mxu0 0
        %1021 = vmatmul.mubr.bf16.gmra.mxu0 %v960
        %v1022 = vpop.f32.mrf.mxu0
        %v1023 = vadd.f32 %v941, %v1022
        %v1024 = vpop.f32.mrf.mxu0
        %v1025 = vpop.f32.mrf.mxu0
        %v1026 = vadd.f32 %v941, %v1025
        %v1027 = vpop.f32.mrf.mxu0
        %1028 = vmatprep.mubr.bf16.mxu0 0
        %1029 = vmatmul.mubr.bf16.gmra.mxu0 %v963
        %v1030 = vpop.f32.mrf.mxu0
        %v1031 = vadd.f32 %v941, %v1030
        %v1032 = vpop.f32.mrf.mxu0
        %v1033 = vpop.f32.mrf.mxu0
        %v1034 = vadd.f32 %v941, %v1033
        %v1035 = vpop.f32.mrf.mxu0
        %1036 = vmatprep.mubr.bf16.mxu0 0
        %1037 = vmatmul.mubr.bf16.gmra.mxu0 %v966
        %v1038 = vpop.f32.mrf.mxu0
        %v1039 = vadd.f32 %v941, %v1038
        %v1040 = vpop.f32.mrf.mxu0
        %v1041 = vpop.f32.mrf.mxu0
        %v1042 = vadd.f32 %v941, %v1041
        %v1043 = vpop.f32.mrf.mxu0
        %1044 = vmatprep.mubr.bf16.mxu0 0
        %1045 = vmatmul.mubr.bf16.gmra.mxu0 %v969
        %v1046 = vpop.f32.mrf.mxu0
        %v1047 = vadd.f32 %v941, %v1046
        %v1048 = vpop.f32.mrf.mxu0
        %v1049 = vpop.f32.mrf.mxu0
        %v1050 = vadd.f32 %v941, %v1049
        %v1051 = vpop.f32.mrf.mxu0
        %1052 = vmatprep.mubr.bf16.mxu0 0
        %1053 = vmatmul.mubr.bf16.gmra.mxu0 %v972
        %v1054 = vpop.f32.mrf.mxu0
        %v1055 = vadd.f32 %v941, %v1054
        %v1056 = vpop.f32.mrf.mxu0
        %v1057 = vpop.f32.mrf.mxu0
        %v1058 = vadd.f32 %v941, %v1057
        %v1059 = vpop.f32.mrf.mxu0
        %1060 = vmatprep.mubr.bf16.mxu0 0
        %1061 = vmatmul.mubr.bf16.gmra.mxu0 %v975
        %v1062 = vpop.f32.mrf.mxu0
        %v1063 = vadd.f32 %v941, %v1062
        %v1064 = vpop.f32.mrf.mxu0
        %v1065 = vpop.f32.mrf.mxu0
        %v1066 = vadd.f32 %v941, %v1065
        %v1067 = vpop.f32.mrf.mxu0
        %1068 = vmatprep.mubr.bf16.mxu0 0
        %1069 = vmatmul.mubr.bf16.gmra.mxu0 %v978
        %v1070 = vpop.f32.mrf.mxu0
        %v1071 = vadd.f32 %v941, %v1070
        %v1072 = vpop.f32.mrf.mxu0
        %v1073 = vpop.f32.mrf.mxu0
        %v1074 = vadd.f32 %v941, %v1073
        %v1075 = vpop.f32.mrf.mxu0
        %1076 = vdwg.mxu0
        %v1077 = vmul.f32 %v1015, 1.442695
        %v1078 = vpow.pop %v1077
        %v1079 = vmul.f32 %v1018, 1.442695
        %v1080 = vpow.pop %v1079
        %v1081 = vmul.f32 %v1023, 1.442695
        %v1082 = vpow.pop %v1081
        %v1083 = vmul.f32 %v1026, 1.442695
        %v1084 = vpow.pop %v1083
        %v1085 = vmul.f32 %v1031, 1.442695
        %v1086 = vpow.pop %v1085
        %v1087 = vmul.f32 %v1034, 1.442695
        %v1088 = vpow.pop %v1087
        %v1089 = vmul.f32 %v1039, 1.442695
        %v1090 = vpow.pop %v1089
        %v1091 = vmul.f32 %v1042, 1.442695
        %v1092 = vpow.pop %v1091
        %v1093 = vmul.f32 %v1047, 1.442695
        %v1094 = vpow.pop %v1093
        %v1095 = vmul.f32 %v1050, 1.442695
        %v1096 = vpow.pop %v1095
        %v1097 = vmul.f32 %v1055, 1.442695
        %v1098 = vpow.pop %v1097
        %v1099 = vmul.f32 %v1058, 1.442695
        %v1100 = vpow.pop %v1099
        %v1101 = vmul.f32 %v1063, 1.442695
        %v1102 = vpow.pop %v1101
        %v1103 = vmul.f32 %v1066, 1.442695
        %v1104 = vpow.pop %v1103
        %v1105 = vmul.f32 %v1071, 1.442695
        %v1106 = vpow.pop %v1105
        %v1107 = vmul.f32 %v1074, 1.442695
        %v1108 = vpow.pop %v1107
        %v1109 = vadd.f32 %v1078, 1.0
        %v1110 = vadd.f32 %v1080, 1.0
        %v1111 = vadd.f32 %v1082, 1.0
        %v1112 = vadd.f32 %v1084, 1.0
        %v1113 = vadd.f32 %v1086, 1.0
        %v1114 = vadd.f32 %v1088, 1.0
        %v1115 = vadd.f32 %v1090, 1.0
        %v1116 = vadd.f32 %v1092, 1.0
        %v1117 = vadd.f32 %v1094, 1.0
        %v1118 = vadd.f32 %v1096, 1.0
        %v1119 = vadd.f32 %v1098, 1.0
        %v1120 = vadd.f32 %v1100, 1.0
        %v1121 = vadd.f32 %v1102, 1.0
        %v1122 = vadd.f32 %v1104, 1.0
        %v1123 = vadd.f32 %v1106, 1.0
        %v1124 = vadd.f32 %v1108, 1.0
        %v1125 = vrcp.pop %v1109
        %v1126 = vrcp.pop %v1110
        %v1127 = vrcp.pop %v1111
        %v1128 = vrcp.pop %v1112
        %v1129 = vrcp.pop %v1113
        %v1130 = vrcp.pop %v1114
        %v1131 = vrcp.pop %v1115
        %v1132 = vrcp.pop %v1116
        %v1133 = vrcp.pop %v1117
        %v1134 = vrcp.pop %v1118
        %v1135 = vrcp.pop %v1119
        %v1136 = vrcp.pop %v1120
        %v1137 = vrcp.pop %v1121
        %v1138 = vrcp.pop %v1122
        %v1139 = vrcp.pop %v1123
        %v1140 = vrcp.pop %v1124
        %v1141 = vlaneseq
        %v1142 = vand.u32 %v1141, 127
        %vm1143 = vcmp.ge.s32.totalorder %v1142, 54
        %vm1144 = vcmp.lt.s32.totalorder %v1142, 63
        %vm1145 = vmand %vm1143, %vm1144
        %v1146 = vsel %vm1145, %v1125, %v1015
        %v1147 = vsel %vm1145, %v1126, %v1018
        %v1148 = vsel %vm1145, %v1127, %v1023
        %v1149 = vsel %vm1145, %v1128, %v1026
        %v1150 = vsel %vm1145, %v1129, %v1031
        %v1151 = vsel %vm1145, %v1130, %v1034
        %v1152 = vsel %vm1145, %v1131, %v1039
        %v1153 = vsel %vm1145, %v1132, %v1042
        %v1154 = vsel %vm1145, %v1133, %v1047
        %v1155 = vsel %vm1145, %v1134, %v1050
        %v1156 = vsel %vm1145, %v1135, %v1055
        %v1157 = vsel %vm1145, %v1136, %v1058
        %v1158 = vsel %vm1145, %v1137, %v1063
        %v1159 = vsel %vm1145, %v1138, %v1066
        %v1160 = vsel %vm1145, %v1139, %v1071
        %v1161 = vsel %vm1145, %v1140, %v1074
        %1162 = vst [vmem:[%s259] sm:$0xff] %v1146
        %1163 = vst [vmem:[%s259 + $0x8] sm:$0xff] %v1147
        %1164 = vst [vmem:[%s259 + $0x10] sm:$0xff] %v1148
        %1165 = vst [vmem:[%s259 + $0x18] sm:$0xff] %v1149
        %1166 = vst [vmem:[%s259 + $0x20] sm:$0xff] %v1150
        %1167 = vst [vmem:[%s259 + $0x28] sm:$0xff] %v1151
        %1168 = vst [vmem:[%s259 + $0x30] sm:$0xff] %v1152
        %1169 = vst [vmem:[%s259 + $0x38] sm:$0xff] %v1153
        %1170 = vst [vmem:[%s259 + $0x40] sm:$0xff] %v1154
        %1171 = vst [vmem:[%s259 + $0x48] sm:$0xff] %v1155
        %1172 = vst [vmem:[%s259 + $0x50] sm:$0xff] %v1156
        %1173 = vst [vmem:[%s259 + $0x58] sm:$0xff] %v1157
        %1174 = vst [vmem:[%s259 + $0x60] sm:$0xff] %v1158
        %1175 = vst [vmem:[%s259 + $0x68] sm:$0xff] %v1159
        %1176 = vst [vmem:[%s259 + $0x70] sm:$0xff] %v1160
        %1177 = vst [vmem:[%s259 + $0x78] sm:$0xff] %v1161
        %s1178 = sand.u32 %s156, 1
        %s1179 = scalar_lea.sflag [#allocation4], %s1178
        %s1180 = sand.u32 %s156, 1
        %s1181 = smul.addr %s1180, 128
        %s1182 = scalar_lea.vmem [#allocation5], %s1181
        // Predicated region
        $region45: #{tpu_custom_call.1} parent=39 // pred_check
          %p1183 = pneg %p166
        $region46: #{tpu_custom_call.1} parent=39 // pred_check_branch
          %1185 = sbr.rel (%p1183) target = $region48
        $region47: #{tpu_custom_call.1} parent=39 // pred_region
          %s1187 = ssub.s32 2048, 2048
          %1188 = vsyncadd %s1179, %s1187
          %s1189 = smul.addr %s26, 32
          %s1190 = sadd.s32 %s27, %s1189
          %s1191 = smul.addr %s1190, 128
          %s1192 = scalar_lea.hbm %s5, %s1191
          %s1193 = sshll.u32 %s1182, 4
          %s1194 = int_to_ptr.vmem [resolvable:$true] %s1193
          %1199 = dma.vmem_to_hbm [thread:$0]  %s1194, 2048, %s1192, %s1179, 128, 256, 8
        $region48: #{tpu_custom_call.1} parent=39 // pred_fallthru
          _
      $region40: #{tpu_custom_call.1} parent=5 // pred_fallthru
        _
      %p1200 = scmp.le.s32.totalorder 2, %s17
      // Predicated region
      $region49: #{tpu_custom_call.1} parent=5 // pred_check
        %p1201 = pneg %p1200
      $region50: #{tpu_custom_call.1} parent=5 // pred_check_branch
        %1203 = sbr.rel (%p1201) target = $region52
      $region51: #{tpu_custom_call.1} parent=5 // pred_region
        %s1204 = ssub.s32 %s17, 2
        // Predicated region
        $region53: #{tpu_custom_call.1} parent=51 // pred_check
          %p1205 = pneg %p172
        $region54: #{tpu_custom_call.1} parent=51 // pred_check_branch
          %1207 = sbr.rel (%p1205) target = $region56
        $region55: #{tpu_custom_call.1} parent=51 // pred_region
          %s1208 = sand.u32 %s157, 1
          %s1209 = scalar_lea.sflag [#allocation4], %s1208
          %s1210 = sand.u32 %s157, 1
          %s1211 = smul.addr %s1210, 128
          %s1212 = scalar_lea.vmem [#allocation5], %s1211
          %1213 = dma.done %s1209, 2048
        $region56: #{tpu_custom_call.1} parent=51 // pred_fallthru
          _
      $region52: #{tpu_custom_call.1} parent=5 // pred_fallthru
        _
    $region6: #{tpu_custom_call.1} parent=1 // loop_footer
      %s21 = sadd.s32 1, %s17
    $region7: #{tpu_custom_call.1} parent=1 // loop_footer_branch
      %16 = sbr.rel target = $region3
    $region8: #{tpu_custom_call.1} parent=1 // loop_exit
      _
    %1214 = vsyncpa [#allocation3], 1
    %s1215 = scalar_lea.sflag [#allocation3], 1
    %1216 = vsyncpa %s1215, 1
    %1217 = vsyncpa [#allocation4], 1
    %s1218 = scalar_lea.sflag [#allocation4], 1
    %1219 = vsyncpa %s1218, 1

</llo_original>
